<compile_context>
chip_gen: v6e
topology: v6e:2x2x1
jax: 0.10.0
libtpu: 0.0.40
codegen_flags: <defaults>
</compile_context>

<pallas_src>
import functools

import jax
import jax.numpy as jnp
from jax.experimental import pallas as pl
from jax.experimental.pallas import tpu as pltpu

LANE = 128


# ------------------------- parameter initialization -------------------------
def _xavier_normal(key, fan_in, fan_out, dtype=jnp.float32):
    std = (2.0 / (fan_in + fan_out)) ** 0.5
    return std * jax.random.normal(key, (fan_in, fan_out), dtype=dtype)


def init_fcnet(key, layers):
    """Mirror FCNet.__init__/initialize_weights: xavier_normal weights, zero bias."""
    params = []
    for i in range(len(layers) - 1):
        key, sub = jax.random.split(key)
        W = _xavier_normal(sub, layers[i], layers[i + 1])
        b = jnp.zeros((1, layers[i + 1]), jnp.float32)
        params.append((W, b))
    return key, params


def init_residual(key, backbone_layers, residual_layers):
    """Mirror ResNet._build_resnet layer shapes (each Linear followed by Tanh)."""
    # TODO(synk): PyTorch's residual Linears keep the default kaiming-uniform init
    # (the residual branch is not an FCNet); we init with xavier here — forward
    # semantics are identical, only the synthetic weight values differ.
    if len(residual_layers) == 0:
        return key, None
    dims = [(backbone_layers[1], residual_layers[0])]
    for layer in range(1, len(residual_layers) - 1):
        dims.append((residual_layers[layer], residual_layers[layer + 1]))
    params = []
    for fi, fo in dims:
        key, sub = jax.random.split(key)
        W = _xavier_normal(sub, fi, fo)
        b = jnp.zeros((1, fo), jnp.float32)
        params.append((W, b))
    return key, params


# --------------------------------- kernel -----------------------------------
def resnet_kernel(n_backbone, n_residual, x_ref, bias_ref, *refs):
    """Full ResNet forward for one (block_b, D) batch tile.

    refs = (W0, W_bb..., W_res..., W_out, out_ref).
    bias_ref packs all biases row-wise (one f32 row per Linear, lane-padded).
    """
    o_ref = refs[-1]
    w_refs = refs[:-1]
    biases = bias_ref[...]                      # (L_pad, maxN) f32, tiny

    def linear(h, layer):
        W = w_refs[layer][...]                  # (K_pad, N_pad); f32 or bf16
        n = W.shape[1]
        b = biases[layer:layer + 1, :n]         # (1, N_pad) f32
        # bf16 (v6e/v7x) or f32 MXU operands; always f32 accumulation.
        y = jnp.dot(h.astype(W.dtype), W, preferred_element_type=jnp.float32)
        return y + b

    # Activations / tanh stay explicitly f32 (v5e VPU/EUP have no bf16 path).
    x = x_ref[...].astype(jnp.float32)

    # input_layer: FCNet of 2 layers -> a single Linear, no activation.
    h = linear(x, 0)

    # backbone: Linear+Tanh for all but the last Linear.
    t = h
    for j in range(n_backbone):
        t = linear(t, 1 + j)
        if j < n_backbone - 1:
            t = jnp.tanh(t)
    bb = t

    # residual branch: every Linear followed by Tanh.
    if n_residual > 0:
        r = h
        for j in range(n_residual):
            r = jnp.tanh(linear(r, 1 + n_backbone + j))
        x2 = r + bb              # x = r + b
    else:
        x2 = h
    # Faithful to the PyTorch forward(): it adds the backbone output a second time
    # (so with a residual branch the output layer sees r + 2*b).
    x2 = x2 + bb                 # x = x + b

    # output layer (single Linear).
    o_ref[...] = linear(x2, 1 + n_backbone + n_residual).astype(o_ref.dtype)


# ------------------------------ padding helpers -------------------------------
def _round_up(n, m):
    return ((n + m - 1) // m) * m


def _pad_params(params, param_dtype):
    """Zero-pad every weight to lane-dense (K_pad, N_pad) multiples of 128 and pack
    all biases into one (L_pad, maxN) f32 table (one row per Linear)."""
    input_p, backbone_p, residual_p, output_p = params
    layers = [input_p] + list(backbone_p) + list(residual_p or []) + [output_p]
    max_n = max(_round_up(W.shape[1], LANE) for W, _ in layers)
    weights, bias_rows = [], []
    for W, b in layers:
        kp = _round_up(W.shape[0], LANE)
        np_ = _round_up(W.shape[1], LANE)
        Wp = jnp.zeros((kp, np_), param_dtype)
        Wp = Wp.at[:W.shape[0], :W.shape[1]].set(W.astype(param_dtype))
        br = jnp.zeros((max_n,), jnp.float32).at[:b.shape[-1]].set(
            b.reshape(-1).astype(jnp.float32))
        weights.append(Wp)
        bias_rows.append(br)
    n_rows = _round_up(len(layers), 8)          # sublane-pad the bias table
    bias_pack = jnp.zeros((n_rows, max_n), jnp.float32)
    bias_pack = bias_pack.at[:len(layers)].set(jnp.stack(bias_rows))
    return weights, bias_pack


# -------------------------------- wrapper ------------------------------------
def resnet_forward(x, params, *, block_b=128, param_dtype=jnp.float32):
    input_p, backbone_p, residual_p, output_p = params
    n_backbone = len(backbone_p)
    n_residual = len(residual_p) if residual_p else 0
    d_out = output_p[0].shape[1]

    weights, bias_pack = _pad_params(params, param_dtype)
    d_in_pad = weights[0].shape[0]
    d_out_pad = weights[-1].shape[1]

    # Pad batch to a multiple of block_b and input features to the lane-padded width.
    B = x.shape[0]
    b_pad = _round_up(B, block_b)
    x_pad = jnp.zeros((b_pad, d_in_pad), jnp.float32)
    x_pad = x_pad.at[:B, :x.shape[1]].set(x.astype(jnp.float32))

    grid = (b_pad // block_b,)
    in_specs = [
        pl.BlockSpec((block_b, d_in_pad), lambda i: (i, 0)),   # batch tile of x
        pl.BlockSpec(bias_pack.shape, lambda i: (0, 0)),       # grid-invariant biases
    ]
    for W in weights:                                          # grid-invariant weights
        in_specs.append(pl.BlockSpec(W.shape, lambda i: (0, 0)))
    out_specs = pl.BlockSpec((block_b, d_out_pad), lambda i: (i, 0))  # lane-dense out

    kernel = functools.partial(resnet_kernel, n_backbone, n_residual)
    out_pad = pl.pallas_call(
        kernel,
        out_shape=jax.ShapeDtypeStruct((b_pad, d_out_pad), jnp.float32),
        grid=grid,
        in_specs=in_specs,
        out_specs=out_specs,
        compiler_params=pltpu.CompilerParams(
            dimension_semantics=("parallel",)),  # batch tiles shard across TCs (v7x)
    )(x_pad, bias_pack, *weights)
    return out_pad[:B, :d_out]


# ----------------------------- pure JAX reference ----------------------------
def resnet_reference(x, params):
    input_p, backbone_p, residual_p, output_p = params
    h = x @ input_p[0] + input_p[1]
    t = h
    for j, (W, b) in enumerate(backbone_p):
        t = t @ W + b
        if j < len(backbone_p) - 1:
            t = jnp.tanh(t)
    bb = t
    if residual_p is not None:
        r = h
        for W, b in residual_p:
            r = jnp.tanh(r @ W + b)
        x2 = r + bb
    else:
        x2 = h
    x2 = x2 + bb
    return x2 @ output_p[0] + output_p[1]


# ---------------------------------- main -------------------------------------
if __name__ == "__main__":
    # ResNet(backbone_layers, residual_layers) with small synthetic sizes.
    backbone_layers = [4, 32, 32, 32, 2]
    residual_layers = [32]
    if len(residual_layers) > 0 and backbone_layers[-2] != residual_layers[-1]:
        raise AssertionError("Output size of backbone net and residual net do not match!")

    key = jax.random.PRNGKey(0)
    key, input_p = init_fcnet(key, backbone_layers[:2])        # Linear(4, 32)
    key, backbone_p = init_fcnet(key, backbone_layers[1:-1])   # Linear(32,32)+Tanh, Linear(32,32)
    key, residual_p = init_residual(key, backbone_layers, residual_layers)  # Linear(32,32)+Tanh
    key, output_p = init_fcnet(key, backbone_layers[-2:])      # Linear(32, 2)
    params = (input_p[0], backbone_p, residual_p, output_p[0])

    key, xk = jax.random.split(key)
    B = 256                        # two 128-row tiles -> grid=(2,), "parallel"
    x = jax.random.normal(xk, (B, backbone_layers[0]), jnp.float32)

    ref = resnet_reference(x, params)

    # f32 path (matches the pure-JAX reference tightly).
    out = jax.block_until_ready(resnet_forward(x, params, block_b=128))
    assert out.shape == (B, backbone_layers[-1])
    assert jnp.allclose(out, ref, atol=1e-5, rtol=1e-5)

    # bf16 MXU-operand path (v6e/v7x); f32 accumulation, looser tolerance.
    out_bf16 = jax.block_until_ready(
        resnet_forward(x, params, block_b=128, param_dtype=jnp.bfloat16))
    assert out_bf16.shape == (B, backbone_layers[-1])
    assert jnp.allclose(out_bf16, ref, atol=1.5e-1, rtol=5e-2)

    print("KERNEL_OK")
</pallas_src>

<mosaic_0001>
module attributes {stable_mosaic.version = 11 : i64} {
  func.func @resnet_kernel(%arg0: i32, %arg1: memref<128x128xf32, #tpu.memory_space<vmem>>, %arg2: memref<8x128xf32, #tpu.memory_space<vmem>>, %arg3: memref<128x128xf32, #tpu.memory_space<vmem>>, %arg4: memref<128x128xf32, #tpu.memory_space<vmem>>, %arg5: memref<128x128xf32, #tpu.memory_space<vmem>>, %arg6: memref<128x128xf32, #tpu.memory_space<vmem>>, %arg7: memref<128x128xf32, #tpu.memory_space<vmem>>, %arg8: memref<128x128xf32, #tpu.memory_space<vmem>>) attributes {dimension_semantics = [#tpu.dimension_semantics<parallel>], iteration_bounds = array<i64: 2>, scalar_prefetch = 0 : i64, scratch_operands = 0 : i64, tpu.core_type = #tpu.core_type<tc>, window_params = [{transform_indices = @transform_0, window_bounds = array<i64: 128, 128>}, {pipeline_mode = #tpu.pipeline_mode<synchronous>, transform_indices = @transform_1, window_bounds = array<i64: 8, 128>}, {pipeline_mode = #tpu.pipeline_mode<synchronous>, transform_indices = @transform_2, window_bounds = array<i64: 128, 128>}, {pipeline_mode = #tpu.pipeline_mode<synchronous>, transform_indices = @transform_3, window_bounds = array<i64: 128, 128>}, {pipeline_mode = #tpu.pipeline_mode<synchronous>, transform_indices = @transform_4, window_bounds = array<i64: 128, 128>}, {pipeline_mode = #tpu.pipeline_mode<synchronous>, transform_indices = @transform_5, window_bounds = array<i64: 128, 128>}, {pipeline_mode = #tpu.pipeline_mode<synchronous>, transform_indices = @transform_6, window_bounds = array<i64: 128, 128>}, {transform_indices = @transform_7, window_bounds = array<i64: 128, 128>}]} {
    %c0 = arith.constant 0 : index
    %c0_0 = arith.constant 0 : index
    %0 = vector.load %arg2[%c0, %c0_0] : memref<8x128xf32, #tpu.memory_space<vmem>>, vector<8x128xf32>
    %c0_1 = arith.constant 0 : index
    %c0_2 = arith.constant 0 : index
    %1 = vector.load %arg1[%c0_1, %c0_2] : memref<128x128xf32, #tpu.memory_space<vmem>>, vector<128x128xf32>
    %c0_3 = arith.constant 0 : index
    %c0_4 = arith.constant 0 : index
    %2 = vector.load %arg3[%c0_3, %c0_4] : memref<128x128xf32, #tpu.memory_space<vmem>>, vector<128x128xf32>
    %3 = vector.extract_strided_slice %0 {offsets = [0, 0], sizes = [1, 128], strides = [1, 1]} : vector<8x128xf32> to vector<1x128xf32>
    %cst = arith.constant dense<0.000000e+00> : vector<128x128xf32>
    %4 = tpu.matmul %1, %2, %cst {dimension_numbers = #tpu.dot_dimension_numbers<[1], [0], [0], [1], [0, 0, 1, 1], [], []>} : vector<128x128xf32>, vector<128x128xf32>, vector<128x128xf32> -> vector<128x128xf32>
    %5 = vector.broadcast %3 : vector<1x128xf32> to vector<128x128xf32>
    %6 = arith.addf %4, %5 : vector<128x128xf32>
    %c0_5 = arith.constant 0 : index
    %c0_6 = arith.constant 0 : index
    %7 = vector.load %arg4[%c0_5, %c0_6] : memref<128x128xf32, #tpu.memory_space<vmem>>, vector<128x128xf32>
    %8 = vector.extract_strided_slice %0 {offsets = [1, 0], sizes = [1, 128], strides = [1, 1]} : vector<8x128xf32> to vector<1x128xf32>
    %cst_7 = arith.constant dense<0.000000e+00> : vector<128x128xf32>
    %9 = tpu.matmul %6, %7, %cst_7 {dimension_numbers = #tpu.dot_dimension_numbers<[1], [0], [0], [1], [0, 0, 1, 1], [], []>} : vector<128x128xf32>, vector<128x128xf32>, vector<128x128xf32> -> vector<128x128xf32>
    %10 = vector.broadcast %8 : vector<1x128xf32> to vector<128x128xf32>
    %11 = arith.addf %9, %10 : vector<128x128xf32>
    %12 = math.tanh %11 : vector<128x128xf32>
    %c0_8 = arith.constant 0 : index
    %c0_9 = arith.constant 0 : index
    %13 = vector.load %arg5[%c0_8, %c0_9] : memref<128x128xf32, #tpu.memory_space<vmem>>, vector<128x128xf32>
    %14 = vector.extract_strided_slice %0 {offsets = [2, 0], sizes = [1, 128], strides = [1, 1]} : vector<8x128xf32> to vector<1x128xf32>
    %cst_10 = arith.constant dense<0.000000e+00> : vector<128x128xf32>
    %15 = tpu.matmul %12, %13, %cst_10 {dimension_numbers = #tpu.dot_dimension_numbers<[1], [0], [0], [1], [0, 0, 1, 1], [], []>} : vector<128x128xf32>, vector<128x128xf32>, vector<128x128xf32> -> vector<128x128xf32>
    %16 = vector.broadcast %14 : vector<1x128xf32> to vector<128x128xf32>
    %17 = arith.addf %15, %16 : vector<128x128xf32>
    %c0_11 = arith.constant 0 : index
    %c0_12 = arith.constant 0 : index
    %18 = vector.load %arg6[%c0_11, %c0_12] : memref<128x128xf32, #tpu.memory_space<vmem>>, vector<128x128xf32>
    %19 = vector.extract_strided_slice %0 {offsets = [3, 0], sizes = [1, 128], strides = [1, 1]} : vector<8x128xf32> to vector<1x128xf32>
    %cst_13 = arith.constant dense<0.000000e+00> : vector<128x128xf32>
    %20 = tpu.matmul %6, %18, %cst_13 {dimension_numbers = #tpu.dot_dimension_numbers<[1], [0], [0], [1], [0, 0, 1, 1], [], []>} : vector<128x128xf32>, vector<128x128xf32>, vector<128x128xf32> -> vector<128x128xf32>
    %21 = vector.broadcast %19 : vector<1x128xf32> to vector<128x128xf32>
    %22 = arith.addf %20, %21 : vector<128x128xf32>
    %23 = math.tanh %22 : vector<128x128xf32>
    %24 = arith.addf %23, %17 : vector<128x128xf32>
    %25 = arith.addf %24, %17 : vector<128x128xf32>
    %c0_14 = arith.constant 0 : index
    %c0_15 = arith.constant 0 : index
    %26 = vector.load %arg7[%c0_14, %c0_15] : memref<128x128xf32, #tpu.memory_space<vmem>>, vector<128x128xf32>
    %27 = vector.extract_strided_slice %0 {offsets = [4, 0], sizes = [1, 128], strides = [1, 1]} : vector<8x128xf32> to vector<1x128xf32>
    %cst_16 = arith.constant dense<0.000000e+00> : vector<128x128xf32>
    %28 = tpu.matmul %25, %26, %cst_16 {dimension_numbers = #tpu.dot_dimension_numbers<[1], [0], [0], [1], [0, 0, 1, 1], [], []>} : vector<128x128xf32>, vector<128x128xf32>, vector<128x128xf32> -> vector<128x128xf32>
    %29 = vector.broadcast %27 : vector<1x128xf32> to vector<128x128xf32>
    %30 = arith.addf %28, %29 : vector<128x128xf32>
    %c0_17 = arith.constant 0 : index
    %c0_18 = arith.constant 0 : index
    %31 = vector.load %arg8[%c0_17, %c0_18] : memref<128x128xf32, #tpu.memory_space<vmem>>, vector<128x128xf32>
    tpu.vector_store %arg8[%c0_17, %c0_18], %30 {strides = array<i32>} : memref<128x128xf32, #tpu.memory_space<vmem>>, vector<128x128xf32>,
    return
  }
  func.func @transform_0(%arg0: i32) -> (i32, i32) {
    %c0_i32 = arith.constant 0 : i32
    %c0_i32_0 = arith.constant 0 : i32
    return %arg0, %c0_i32 : i32, i32
  }
  func.func @transform_1(%arg0: i32) -> (i32, i32) {
    %c0_i32 = arith.constant 0 : i32
    %c0_i32_0 = arith.constant 0 : i32
    %c0_i32_1 = arith.constant 0 : i32
    return %c0_i32, %c0_i32_0 : i32, i32
  }
  func.func @transform_2(%arg0: i32) -> (i32, i32) {
    %c0_i32 = arith.constant 0 : i32
    %c0_i32_0 = arith.constant 0 : i32
    %c0_i32_1 = arith.constant 0 : i32
    return %c0_i32, %c0_i32_0 : i32, i32
  }
  func.func @transform_3(%arg0: i32) -> (i32, i32) {
    %c0_i32 = arith.constant 0 : i32
    %c0_i32_0 = arith.constant 0 : i32
    %c0_i32_1 = arith.constant 0 : i32
    return %c0_i32, %c0_i32_0 : i32, i32
  }
  func.func @transform_4(%arg0: i32) -> (i32, i32) {
    %c0_i32 = arith.constant 0 : i32
    %c0_i32_0 = arith.constant 0 : i32
    %c0_i32_1 = arith.constant 0 : i32
    return %c0_i32, %c0_i32_0 : i32, i32
  }
  func.func @transform_5(%arg0: i32) -> (i32, i32) {
    %c0_i32 = arith.constant 0 : i32
    %c0_i32_0 = arith.constant 0 : i32
    %c0_i32_1 = arith.constant 0 : i32
    return %c0_i32, %c0_i32_0 : i32, i32
  }
  func.func @transform_6(%arg0: i32) -> (i32, i32) {
    %c0_i32 = arith.constant 0 : i32
    %c0_i32_0 = arith.constant 0 : i32
    %c0_i32_1 = arith.constant 0 : i32
    return %c0_i32, %c0_i32_0 : i32, i32
  }
  func.func @transform_7(%arg0: i32) -> (i32, i32) {
    %c0_i32 = arith.constant 0 : i32
    %c0_i32_0 = arith.constant 0 : i32
    return %arg0, %c0_i32 : i32, i32
  }
}

</mosaic_0001>

<llo_original>
// kernel: tpu_custom_call.1
$region0: #{tpu_custom_call.1}
  #allocation0 [shape = 'u32[]', space=smem, size = 0x4, offset = 0x4, fixed_abs, tag = 'smem constant byte address 0x4 - core index']
  #allocation1 [shape = 'u32[144,128]{1,0:T(1,128)}', space=vmem, size = 0x12000, scoped, tag = 'internal scratch']
  %s0 = inlined_call_operand.hbm [shape: f32[256,128], index: 0, kind: input, shape index: {}]
  %s1 = inlined_call_operand.hbm [shape: f32[8,128], index: 1, kind: input, shape index: {}]
  %s2 = inlined_call_operand.hbm [shape: f32[128,128], index: 2, kind: input, shape index: {}]
  %s3 = inlined_call_operand.hbm [shape: f32[128,128], index: 3, kind: input, shape index: {}]
  %s4 = inlined_call_operand.hbm [shape: f32[128,128], index: 4, kind: input, shape index: {}]
  %s5 = inlined_call_operand.hbm [shape: f32[128,128], index: 5, kind: input, shape index: {}]
  %s6 = inlined_call_operand.hbm [shape: f32[128,128], index: 6, kind: input, shape index: {}]
  %s7 = inlined_call_operand.hbm [shape: f32[256,128], index: 7, kind: output, shape index: {}]
  %s8 = sld [smem:[#allocation0]]
  $region89: #{tpu_custom_call.1} parent=0
    _
  %s10 = ssub.s32 1, %s8
  %s11 = scalar_select 0, %s10, %s8
  $region1: #{tpu_custom_call.1} parent=0
    #allocation2 [shape = 'u8[131072]{0}', space=vmem, size = 0x20000, scoped, tag = 'input window, operand 0']
    #allocation3 [shape = 's32[2]{0}', space=sflag, size = 0x8, scoped, tag = 'scoped memory for tpu_custom_call.1']
    #allocation4 [shape = 's32[2]{0}', space=sflag, size = 0x8, scoped, tag = 'scoped memory for tpu_custom_call.1']
    #allocation5 [shape = 'u8[4096]{0}', space=vmem, size = 0x1000, scoped, tag = 'input window, operand 1, single buffered']
    #allocation6 [shape = 's32[1]{0}', space=sflag, size = 0x4, scoped, tag = 'scoped memory for tpu_custom_call.1']
    #allocation7 [shape = 'u8[65536]{0}', space=vmem, size = 0x10000, scoped, tag = 'input window, operand 2, single buffered']
    #allocation8 [shape = 'u8[65536]{0}', space=vmem, size = 0x10000, scoped, tag = 'input window, operand 3, single buffered']
    #allocation9 [shape = 's32[1]{0}', space=sflag, size = 0x4, scoped, tag = 'scoped memory for tpu_custom_call.1']
    #allocation10 [shape = 'u8[65536]{0}', space=vmem, size = 0x10000, scoped, tag = 'input window, operand 4, single buffered']
    #allocation11 [shape = 'u8[65536]{0}', space=vmem, size = 0x10000, scoped, tag = 'input window, operand 5, single buffered']
    #allocation12 [shape = 's32[1]{0}', space=sflag, size = 0x4, scoped, tag = 'scoped memory for tpu_custom_call.1']
    #allocation13 [shape = 'u8[65536]{0}', space=vmem, size = 0x10000, scoped, tag = 'input window, operand 6, single buffered']
    #allocation14 [shape = 'u8[131072]{0}', space=vmem, size = 0x20000, scoped, tag = 'output window, operand 0']
    %12 = vsyncpa [#allocation3], 0
    %s13 = scalar_lea.sflag [#allocation3], 1
    %14 = vsyncpa %s13, 0
    %15 = vsyncpa [#allocation6], 0
    %16 = vsyncpa [#allocation9], 0
    %17 = vsyncpa [#allocation12], 0
    %18 = vsyncpa [#allocation4], 0
    %s19 = scalar_lea.sflag [#allocation4], 1
    %20 = vsyncpa %s19, 0
    loop: start=0, step=1, limit=4
    $region2: #{tpu_custom_call.1} parent=1 // loop_pre_header
      _
    $region3: #{tpu_custom_call.1} parent=1 // loop_header
      %s22 = sphi 0, %s26
      %p23 = scmp.ge.s32.totalorder %s22, 4
      %s32 = sphi 0, %s34
      %s35 = sphi 0, %s32
      %s36 = sphi 0, %s35
      %s52 = sphi 0, %s36
      %s56 = sphi 0, %s56
      %s58 = sphi 0, %s56
      %s59 = sphi 0, %s58
      %s73 = sphi 0, %s59
      %s77 = sphi 0, %s77
      %s79 = sphi 0, %s77
      %s80 = sphi 0, %s79
      %s94 = sphi 0, %s80
      %s98 = sphi 0, %s98
      %s100 = sphi 0, %s98
      %s101 = sphi 0, %s100
      %s115 = sphi 0, %s101
      %s119 = sphi 0, %s119
      %s121 = sphi 0, %s119
      %s122 = sphi 0, %s121
      %s136 = sphi 0, %s122
      %s140 = sphi 0, %s140
      %s142 = sphi 0, %s140
      %s143 = sphi 0, %s142
      %s157 = sphi 0, %s143
      %s161 = sphi 0, %s161
      %s163 = sphi 0, %s161
      %s164 = sphi 0, %s163
      %s178 = sphi 0, %s164
      %s184 = sphi 0, %s186
      %s187 = sphi 0, %s184
      %s188 = sphi 0, %s187
      %s204 = sphi 0, %s188
    $region4: #{tpu_custom_call.1} parent=1 // loop_header_branch
      %25 = sbr.rel (%p23) target = $region8
    $region5: #{tpu_custom_call.1} parent=1 // loop_body
      %s27 = ssub.s32 %s22, 1
      %s28 = ssub.s32 %s22, 2
      %s29 = sadd.s32 %s22, 1
      %s30 = ssub.s32 %s22, %s29
      %p31 = scmp.eq.s32.totalorder %s30, 0
      %s33 = sadd.s32 %s32, 1
      %s34 = scalar_select %p31, %s32, %s33
      %p37 = pneg %p31
      %p38 = scmp.eq.s32.totalorder %s22, 1
      %p39 = por %p37, %p38
      %p40 = scmp.ne.s32.totalorder %s32, %s35
      %p41 = scmp.eq.s32.totalorder %s22, 0
      %p42 = por %p40, %p41
      %p43 = scmp.ne.s32.totalorder %s32, %s35
      %p44 = scmp.eq.s32.totalorder %s27, 1
      %p45 = por %p43, %p44
      %p46 = scmp.ne.s32.totalorder %s35, %s36
      %p47 = scmp.eq.s32.totalorder %s27, 0
      %p48 = por %p46, %p47
      %p49 = scmp.ne.s32.totalorder %s35, %s36
      %p50 = scmp.eq.s32.totalorder %s28, 1
      %p51 = por %p49, %p50
      %p53 = scmp.ne.s32.totalorder %s36, %s52
      %p54 = scmp.eq.s32.totalorder %s28, 0
      %p55 = por %p53, %p54
      %s57 = sadd.s32 %s56, 1
      %p60 = scmp.eq.s32.totalorder %s22, 1
      %p61 = scmp.ne.s32.totalorder %s56, %s58
      %p62 = scmp.eq.s32.totalorder %s22, 0
      %p63 = por %p61, %p62
      %p64 = scmp.ne.s32.totalorder %s56, %s58
      %p65 = scmp.eq.s32.totalorder %s27, 1
      %p66 = por %p64, %p65
      %p67 = scmp.ne.s32.totalorder %s58, %s59
      %p68 = scmp.eq.s32.totalorder %s27, 0
      %p69 = por %p67, %p68
      %p70 = scmp.ne.s32.totalorder %s58, %s59
      %p71 = scmp.eq.s32.totalorder %s28, 1
      %p72 = por %p70, %p71
      %p74 = scmp.ne.s32.totalorder %s59, %s73
      %p75 = scmp.eq.s32.totalorder %s28, 0
      %p76 = por %p74, %p75
      %s78 = sadd.s32 %s77, 1
      %p81 = scmp.eq.s32.totalorder %s22, 1
      %p82 = scmp.ne.s32.totalorder %s77, %s79
      %p83 = scmp.eq.s32.totalorder %s22, 0
      %p84 = por %p82, %p83
      %p85 = scmp.ne.s32.totalorder %s77, %s79
      %p86 = scmp.eq.s32.totalorder %s27, 1
      %p87 = por %p85, %p86
      %p88 = scmp.ne.s32.totalorder %s79, %s80
      %p89 = scmp.eq.s32.totalorder %s27, 0
      %p90 = por %p88, %p89
      %p91 = scmp.ne.s32.totalorder %s79, %s80
      %p92 = scmp.eq.s32.totalorder %s28, 1
      %p93 = por %p91, %p92
      %p95 = scmp.ne.s32.totalorder %s80, %s94
      %p96 = scmp.eq.s32.totalorder %s28, 0
      %p97 = por %p95, %p96
      %s99 = sadd.s32 %s98, 1
      %p102 = scmp.eq.s32.totalorder %s22, 1
      %p103 = scmp.ne.s32.totalorder %s98, %s100
      %p104 = scmp.eq.s32.totalorder %s22, 0
      %p105 = por %p103, %p104
      %p106 = scmp.ne.s32.totalorder %s98, %s100
      %p107 = scmp.eq.s32.totalorder %s27, 1
      %p108 = por %p106, %p107
      %p109 = scmp.ne.s32.totalorder %s100, %s101
      %p110 = scmp.eq.s32.totalorder %s27, 0
      %p111 = por %p109, %p110
      %p112 = scmp.ne.s32.totalorder %s100, %s101
      %p113 = scmp.eq.s32.totalorder %s28, 1
      %p114 = por %p112, %p113
      %p116 = scmp.ne.s32.totalorder %s101, %s115
      %p117 = scmp.eq.s32.totalorder %s28, 0
      %p118 = por %p116, %p117
      %s120 = sadd.s32 %s119, 1
      %p123 = scmp.eq.s32.totalorder %s22, 1
      %p124 = scmp.ne.s32.totalorder %s119, %s121
      %p125 = scmp.eq.s32.totalorder %s22, 0
      %p126 = por %p124, %p125
      %p127 = scmp.ne.s32.totalorder %s119, %s121
      %p128 = scmp.eq.s32.totalorder %s27, 1
      %p129 = por %p127, %p128
      %p130 = scmp.ne.s32.totalorder %s121, %s122
      %p131 = scmp.eq.s32.totalorder %s27, 0
      %p132 = por %p130, %p131
      %p133 = scmp.ne.s32.totalorder %s121, %s122
      %p134 = scmp.eq.s32.totalorder %s28, 1
      %p135 = por %p133, %p134
      %p137 = scmp.ne.s32.totalorder %s122, %s136
      %p138 = scmp.eq.s32.totalorder %s28, 0
      %p139 = por %p137, %p138
      %s141 = sadd.s32 %s140, 1
      %p144 = scmp.eq.s32.totalorder %s22, 1
      %p145 = scmp.ne.s32.totalorder %s140, %s142
      %p146 = scmp.eq.s32.totalorder %s22, 0
      %p147 = por %p145, %p146
      %p148 = scmp.ne.s32.totalorder %s140, %s142
      %p149 = scmp.eq.s32.totalorder %s27, 1
      %p150 = por %p148, %p149
      %p151 = scmp.ne.s32.totalorder %s142, %s143
      %p152 = scmp.eq.s32.totalorder %s27, 0
      %p153 = por %p151, %p152
      %p154 = scmp.ne.s32.totalorder %s142, %s143
      %p155 = scmp.eq.s32.totalorder %s28, 1
      %p156 = por %p154, %p155
      %p158 = scmp.ne.s32.totalorder %s143, %s157
      %p159 = scmp.eq.s32.totalorder %s28, 0
      %p160 = por %p158, %p159
      %s162 = sadd.s32 %s161, 1
      %p165 = scmp.eq.s32.totalorder %s22, 1
      %p166 = scmp.ne.s32.totalorder %s161, %s163
      %p167 = scmp.eq.s32.totalorder %s22, 0
      %p168 = por %p166, %p167
      %p169 = scmp.ne.s32.totalorder %s161, %s163
      %p170 = scmp.eq.s32.totalorder %s27, 1
      %p171 = por %p169, %p170
      %p172 = scmp.ne.s32.totalorder %s163, %s164
      %p173 = scmp.eq.s32.totalorder %s27, 0
      %p174 = por %p172, %p173
      %p175 = scmp.ne.s32.totalorder %s163, %s164
      %p176 = scmp.eq.s32.totalorder %s28, 1
      %p177 = por %p175, %p176
      %p179 = scmp.ne.s32.totalorder %s164, %s178
      %p180 = scmp.eq.s32.totalorder %s28, 0
      %p181 = por %p179, %p180
      %s182 = ssub.s32 %s22, %s29
      %p183 = scmp.eq.s32.totalorder %s182, 0
      %s185 = sadd.s32 %s184, 1
      %s186 = scalar_select %p183, %s184, %s185
      %p189 = pneg %p183
      %p190 = scmp.eq.s32.totalorder %s22, 1
      %p191 = por %p189, %p190
      %p192 = scmp.ne.s32.totalorder %s184, %s187
      %p193 = scmp.eq.s32.totalorder %s22, 0
      %p194 = por %p192, %p193
      %p195 = scmp.ne.s32.totalorder %s184, %s187
      %p196 = scmp.eq.s32.totalorder %s27, 1
      %p197 = por %p195, %p196
      %p198 = scmp.ne.s32.totalorder %s187, %s188
      %p199 = scmp.eq.s32.totalorder %s27, 0
      %p200 = por %p198, %p199
      %p201 = scmp.ne.s32.totalorder %s187, %s188
      %p202 = scmp.eq.s32.totalorder %s28, 1
      %p203 = por %p201, %p202
      %p205 = scmp.ne.s32.totalorder %s188, %s204
      %p206 = scmp.eq.s32.totalorder %s28, 0
      %p207 = por %p205, %p206
      %p208 = scmp.le.s32.totalorder 1, %s22
      %p209 = scmp.lt.s32.totalorder %s22, 3
      %p210 = pnand %p208, %p209
      %p211 = pneg %p210
      // Predicated region
      $region9: #{tpu_custom_call.1} parent=5 // pred_check
        _
      $region10: #{tpu_custom_call.1} parent=5 // pred_check_branch
        %213 = sbr.rel (%p210) target = $region12
      $region11: #{tpu_custom_call.1} parent=5 // pred_region
        %s214 = ssub.s32 %s22, 1
        // Predicated region
        $region13: #{tpu_custom_call.1} parent=11 // pred_check
          %p215 = pneg %p69
        $region14: #{tpu_custom_call.1} parent=11 // pred_check_branch
          %217 = sbr.rel (%p215) target = $region16
        $region15: #{tpu_custom_call.1} parent=11 // pred_region
          %s219 = ssub.s32 128, 128
          %220 = vsyncadd [#allocation6], %s219
          %s222 = sshll.u32 [#allocation5], 4
          %s223 = int_to_ptr.vmem [resolvable:$true] %s222
          %225 = dma.hbm_to_vmem [thread:$0]  %s1, 128, %s223, [#allocation6]
        $region16: #{tpu_custom_call.1} parent=11 // pred_fallthru
          _
        // Predicated region
        $region17: #{tpu_custom_call.1} parent=11 // pred_check
          %p226 = pneg %p90
        $region18: #{tpu_custom_call.1} parent=11 // pred_check_branch
          %228 = sbr.rel (%p226) target = $region20
        $region19: #{tpu_custom_call.1} parent=11 // pred_region
          %s230 = ssub.s32 2048, 2048
          %231 = vsyncadd [#allocation6], %s230
          %s232 = sshll.u32 [#allocation7], 4
          %s233 = int_to_ptr.vmem [resolvable:$true] %s232
          %238 = dma.hbm_to_vmem [thread:$0]  %s2, 2048, %s233, [#allocation6], 128, 128, 8
        $region20: #{tpu_custom_call.1} parent=11 // pred_fallthru
          _
        // Predicated region
        $region21: #{tpu_custom_call.1} parent=11 // pred_check
          %p239 = pneg %p111
        $region22: #{tpu_custom_call.1} parent=11 // pred_check_branch
          %241 = sbr.rel (%p239) target = $region24
        $region23: #{tpu_custom_call.1} parent=11 // pred_region
          %s243 = ssub.s32 2048, 2048
          %244 = vsyncadd [#allocation9], %s243
          %s245 = sshll.u32 [#allocation8], 4
          %s246 = int_to_ptr.vmem [resolvable:$true] %s245
          %251 = dma.hbm_to_vmem [thread:$0]  %s3, 2048, %s246, [#allocation9], 128, 128, 8
        $region24: #{tpu_custom_call.1} parent=11 // pred_fallthru
          _
        // Predicated region
        $region25: #{tpu_custom_call.1} parent=11 // pred_check
          %p252 = pneg %p132
        $region26: #{tpu_custom_call.1} parent=11 // pred_check_branch
          %254 = sbr.rel (%p252) target = $region28
        $region27: #{tpu_custom_call.1} parent=11 // pred_region
          %s256 = ssub.s32 2048, 2048
          %257 = vsyncadd [#allocation9], %s256
          %s258 = sshll.u32 [#allocation10], 4
          %s259 = int_to_ptr.vmem [resolvable:$true] %s258
          %264 = dma.hbm_to_vmem [thread:$0]  %s4, 2048, %s259, [#allocation9], 128, 128, 8
        $region28: #{tpu_custom_call.1} parent=11 // pred_fallthru
          _
        // Predicated region
        $region29: #{tpu_custom_call.1} parent=11 // pred_check
          %p265 = pneg %p153
        $region30: #{tpu_custom_call.1} parent=11 // pred_check_branch
          %267 = sbr.rel (%p265) target = $region32
        $region31: #{tpu_custom_call.1} parent=11 // pred_region
          %s269 = ssub.s32 2048, 2048
          %270 = vsyncadd [#allocation12], %s269
          %s271 = sshll.u32 [#allocation11], 4
          %s272 = int_to_ptr.vmem [resolvable:$true] %s271
          %277 = dma.hbm_to_vmem [thread:$0]  %s5, 2048, %s272, [#allocation12], 128, 128, 8
        $region32: #{tpu_custom_call.1} parent=11 // pred_fallthru
          _
        // Predicated region
        $region33: #{tpu_custom_call.1} parent=11 // pred_check
          %p278 = pneg %p174
        $region34: #{tpu_custom_call.1} parent=11 // pred_check_branch
          %280 = sbr.rel (%p278) target = $region36
        $region35: #{tpu_custom_call.1} parent=11 // pred_region
          %s282 = ssub.s32 2048, 2048
          %283 = vsyncadd [#allocation12], %s282
          %s284 = sshll.u32 [#allocation13], 4
          %s285 = int_to_ptr.vmem [resolvable:$true] %s284
          %290 = dma.hbm_to_vmem [thread:$0]  %s6, 2048, %s285, [#allocation12], 128, 128, 8
        $region36: #{tpu_custom_call.1} parent=11 // pred_fallthru
          _
      $region12: #{tpu_custom_call.1} parent=5 // pred_fallthru
        _
      %p291 = scmp.lt.s32.totalorder %s22, 2
      // Predicated region
      $region37: #{tpu_custom_call.1} parent=5 // pred_check
        %p292 = pneg %p291
      $region38: #{tpu_custom_call.1} parent=5 // pred_check_branch
        %294 = sbr.rel (%p292) target = $region40
      $region39: #{tpu_custom_call.1} parent=5 // pred_region
        // Predicated region
        $region41: #{tpu_custom_call.1} parent=39 // pred_check
          %p295 = pneg %p42
        $region42: #{tpu_custom_call.1} parent=39 // pred_check_branch
          %297 = sbr.rel (%p295) target = $region44
        $region43: #{tpu_custom_call.1} parent=39 // pred_region
          %s298 = sand.u32 %s32, 1
          %s299 = scalar_lea.sflag [#allocation3], %s298
          %s300 = sand.u32 %s32, 1
          %s301 = smul.addr %s300, 128
          %s302 = scalar_lea.vmem [#allocation2], %s301
          %s303 = smul.u32 16, %s22
          %s305 = ssub.s32 2048, 2048
          %306 = vsyncadd %s299, %s305
          %s307 = smul.addr %s303, 128
          %s308 = scalar_lea.hbm %s0, %s307
          %s309 = sshll.u32 %s302, 4
          %s310 = int_to_ptr.vmem [resolvable:$true] %s309
          %315 = dma.hbm_to_vmem [thread:$0]  %s308, 2048, %s310, %s299, 128, 128, 8
        $region44: #{tpu_custom_call.1} parent=39 // pred_fallthru
          _
      $region40: #{tpu_custom_call.1} parent=5 // pred_fallthru
        _
      %p316 = scmp.le.s32.totalorder 1, %s22
      %p317 = scmp.lt.s32.totalorder %s22, 3
      %p318 = pnand %p316, %p317
      %p319 = pneg %p318
      // Predicated region
      $region45: #{tpu_custom_call.1} parent=5 // pred_check
        _
      $region46: #{tpu_custom_call.1} parent=5 // pred_check_branch
        %321 = sbr.rel (%p318) target = $region48
      $region47: #{tpu_custom_call.1} parent=5 // pred_region
        %s322 = ssub.s32 %s22, 1
        %s323 = sand.u32 %s35, 1
        %s324 = scalar_lea.sflag [#allocation3], %s323
        %s325 = sand.u32 %s35, 1
        %s326 = smul.addr %s325, 128
        %s327 = scalar_lea.vmem [#allocation2], %s326
        // Predicated region
        $region49: #{tpu_custom_call.1} parent=47 // pred_check
          %p328 = pneg %p48
        $region50: #{tpu_custom_call.1} parent=47 // pred_check_branch
          %330 = sbr.rel (%p328) target = $region52
        $region51: #{tpu_custom_call.1} parent=47 // pred_region
          %331 = dma.done %s324, 2048
        $region52: #{tpu_custom_call.1} parent=47 // pred_fallthru
          _
        // Predicated region
        $region53: #{tpu_custom_call.1} parent=47 // pred_check
          %p332 = pneg %p69
        $region54: #{tpu_custom_call.1} parent=47 // pred_check_branch
          %334 = sbr.rel (%p332) target = $region56
        $region55: #{tpu_custom_call.1} parent=47 // pred_region
          %335 = dma.done [#allocation6], 128
        $region56: #{tpu_custom_call.1} parent=47 // pred_fallthru
          _
        // Predicated region
        $region57: #{tpu_custom_call.1} parent=47 // pred_check
          %p336 = pneg %p90
        $region58: #{tpu_custom_call.1} parent=47 // pred_check_branch
          %338 = sbr.rel (%p336) target = $region60
        $region59: #{tpu_custom_call.1} parent=47 // pred_region
          %339 = dma.done [#allocation6], 2048
        $region60: #{tpu_custom_call.1} parent=47 // pred_fallthru
          _
        // Predicated region
        $region61: #{tpu_custom_call.1} parent=47 // pred_check
          %p340 = pneg %p111
        $region62: #{tpu_custom_call.1} parent=47 // pred_check_branch
          %342 = sbr.rel (%p340) target = $region64
        $region63: #{tpu_custom_call.1} parent=47 // pred_region
          %343 = dma.done [#allocation9], 2048
        $region64: #{tpu_custom_call.1} parent=47 // pred_fallthru
          _
        // Predicated region
        $region65: #{tpu_custom_call.1} parent=47 // pred_check
          %p344 = pneg %p132
        $region66: #{tpu_custom_call.1} parent=47 // pred_check_branch
          %346 = sbr.rel (%p344) target = $region68
        $region67: #{tpu_custom_call.1} parent=47 // pred_region
          %347 = dma.done [#allocation9], 2048
        $region68: #{tpu_custom_call.1} parent=47 // pred_fallthru
          _
        // Predicated region
        $region69: #{tpu_custom_call.1} parent=47 // pred_check
          %p348 = pneg %p153
        $region70: #{tpu_custom_call.1} parent=47 // pred_check_branch
          %350 = sbr.rel (%p348) target = $region72
        $region71: #{tpu_custom_call.1} parent=47 // pred_region
          %351 = dma.done [#allocation12], 2048
        $region72: #{tpu_custom_call.1} parent=47 // pred_fallthru
          _
        // Predicated region
        $region73: #{tpu_custom_call.1} parent=47 // pred_check
          %p352 = pneg %p174
        $region74: #{tpu_custom_call.1} parent=47 // pred_check_branch
          %354 = sbr.rel (%p352) target = $region76
        $region75: #{tpu_custom_call.1} parent=47 // pred_region
          %355 = dma.done [#allocation12], 2048
        $region76: #{tpu_custom_call.1} parent=47 // pred_fallthru
          _
        %s356 = sand.u32 %s35, 1
        %s357 = scalar_lea.sflag [#allocation3], %s356
        %s358 = sand.u32 %s35, 1
        %s359 = smul.addr %s358, 128
        %s360 = scalar_lea.vmem [#allocation2], %s359
        %p361 = pneg %p48
        %p362 = pneg %p45
        %p363 = pneg %p69
        %p364 = pneg %p66
        %p365 = pneg %p90
        %p366 = pneg %p87
        %p367 = pneg %p111
        %p368 = pneg %p108
        %p369 = pneg %p132
        %p370 = pneg %p129
        %p371 = pneg %p153
        %p372 = pneg %p150
        %p373 = pneg %p174
        %p374 = pneg %p171
        %p375 = pneg %p200
        %p376 = pneg %p197
        %s377 = sand.u32 %s187, 1
        %s378 = scalar_lea.sflag [#allocation4], %s377
        %s379 = sand.u32 %s187, 1
        %s380 = smul.addr %s379, 128
        %s381 = scalar_lea.vmem [#allocation14], %s380
        %s382 = smul.u32 16, %s27
        %s383 = smul.u32 16, %s27
        %v384 = vld [vmem:[#allocation5] sm:$0xff]
        %v385 = vld [vmem:[%s327] sm:$0xff]
        %v386 = vld [vmem:[%s327 + $0x8] sm:$0xff]
        %v387 = vld [vmem:[%s327 + $0x10] sm:$0xff]
        %v388 = vld [vmem:[%s327 + $0x18] sm:$0xff]
        %v389 = vld [vmem:[%s327 + $0x20] sm:$0xff]
        %v390 = vld [vmem:[%s327 + $0x28] sm:$0xff]
        %v391 = vld [vmem:[%s327 + $0x30] sm:$0xff]
        %v392 = vld [vmem:[%s327 + $0x38] sm:$0xff]
        %v393 = vld [vmem:[%s327 + $0x40] sm:$0xff]
        %v394 = vld [vmem:[%s327 + $0x48] sm:$0xff]
        %v395 = vld [vmem:[%s327 + $0x50] sm:$0xff]
        %v396 = vld [vmem:[%s327 + $0x58] sm:$0xff]
        %v397 = vld [vmem:[%s327 + $0x60] sm:$0xff]
        %v398 = vld [vmem:[%s327 + $0x68] sm:$0xff]
        %v399 = vld [vmem:[%s327 + $0x70] sm:$0xff]
        %v400 = vld [vmem:[%s327 + $0x78] sm:$0xff]
        %v401 = vld [vmem:[#allocation7] sm:$0xff]
        %v402 = vld [vmem:[#allocation7 + $0x8] sm:$0xff]
        %v403 = vld [vmem:[#allocation7 + $0x10] sm:$0xff]
        %v404 = vld [vmem:[#allocation7 + $0x18] sm:$0xff]
        %v405 = vld [vmem:[#allocation7 + $0x20] sm:$0xff]
        %v406 = vld [vmem:[#allocation7 + $0x28] sm:$0xff]
        %v407 = vld [vmem:[#allocation7 + $0x30] sm:$0xff]
        %v408 = vld [vmem:[#allocation7 + $0x38] sm:$0xff]
        %v409 = vld [vmem:[#allocation7 + $0x40] sm:$0xff]
        %v410 = vld [vmem:[#allocation7 + $0x48] sm:$0xff]
        %v411 = vld [vmem:[#allocation7 + $0x50] sm:$0xff]
        %v412 = vld [vmem:[#allocation7 + $0x58] sm:$0xff]
        %v413 = vld [vmem:[#allocation7 + $0x60] sm:$0xff]
        %v414 = vld [vmem:[#allocation7 + $0x68] sm:$0xff]
        %v415 = vld [vmem:[#allocation7 + $0x70] sm:$0xff]
        %v416 = vld [vmem:[#allocation7 + $0x78] sm:$0xff]
        %v417 = vlaneseq
        %v418 = vshrl.u32 %v417, 7
        %v419 = vsub.s32 0, %v418
        %v420 = vrot.slane %v384, %v419
        %421 = vmatprep.subr.mxu0 0.0
        %422 = vmatpush1.msra.mxu0 %v416
        %423 = vmatprep.subr.mxu0 0.0
        %424 = vmatpush1.msra.mxu0 %v415
        %425 = vmatprep.subr.mxu0 0.0
        %426 = vmatpush1.msra.mxu0 %v414
        %427 = vmatprep.subr.mxu0 0.0
        %428 = vmatpush1.msra.mxu0 %v413
        %429 = vmatprep.subr.mxu0 0.0
        %430 = vmatpush1.msra.mxu0 %v412
        %431 = vmatprep.subr.mxu0 0.0
        %432 = vmatpush1.msra.mxu0 %v411
        %433 = vmatprep.subr.mxu0 0.0
        %434 = vmatpush1.msra.mxu0 %v410
        %435 = vmatprep.subr.mxu0 0.0
        %436 = vmatpush1.msra.mxu0 %v409
        %437 = vmatprep.subr.mxu0 0.0
        %438 = vmatpush1.msra.mxu0 %v408
        %439 = vmatprep.subr.mxu0 0.0
        %440 = vmatpush1.msra.mxu0 %v407
        %441 = vmatprep.subr.mxu0 0.0
        %442 = vmatpush1.msra.mxu0 %v406
        %443 = vmatprep.subr.mxu0 0.0
        %444 = vmatpush1.msra.mxu0 %v405
        %445 = vmatprep.subr.mxu0 0.0
        %446 = vmatpush1.msra.mxu0 %v404
        %447 = vmatprep.subr.mxu0 0.0
        %448 = vmatpush1.msra.mxu0 %v403
        %449 = vmatprep.subr.mxu0 0.0
        %450 = vmatpush1.msra.mxu0 %v402
        %451 = vmatprep.subr.mxu0 0.0
        %452 = vmatpush1.msra.mxu0 %v401
        %453 = vmatprep.subr.mxu0 0.0
        %454 = vmatpush2.msra.mxu0 0.0
        %455 = vmatprep.subr.mxu0 0.0
        %456 = vmatpush2.msra.mxu0 0.0
        %457 = vmatprep.subr.mxu0 0.0
        %458 = vmatpush2.msra.mxu0 0.0
        %459 = vmatprep.subr.mxu0 0.0
        %460 = vmatpush2.msra.mxu0 0.0
        %461 = vmatprep.subr.mxu0 0.0
        %462 = vmatpush2.msra.mxu0 0.0
        %463 = vmatprep.subr.mxu0 0.0
        %464 = vmatpush2.msra.mxu0 0.0
        %465 = vmatprep.subr.mxu0 0.0
        %466 = vmatpush2.msra.mxu0 0.0
        %467 = vmatprep.subr.mxu0 0.0
        %468 = vmatpush2.msra.mxu0 0.0
        %469 = vmatprep.subr.mxu0 0.0
        %470 = vmatpush2.msra.mxu0 0.0
        %471 = vmatprep.subr.mxu0 0.0
        %472 = vmatpush2.msra.mxu0 0.0
        %473 = vmatprep.subr.mxu0 0.0
        %474 = vmatpush2.msra.mxu0 0.0
        %475 = vmatprep.subr.mxu0 0.0
        %476 = vmatpush2.msra.mxu0 0.0
        %477 = vmatprep.subr.mxu0 0.0
        %478 = vmatpush2.msra.mxu0 0.0
        %479 = vmatprep.subr.mxu0 0.0
        %480 = vmatpush2.msra.mxu0 0.0
        %481 = vmatprep.subr.mxu0 0.0
        %482 = vmatpush2.msra.mxu0 0.0
        %483 = vmatprep.subr.mxu0 0.0
        %484 = vmatpush2.msra.mxu0 0.0
        %485 = vmatprep.mubr.f32.mxu0 0.0
        %486 = vmatmul.mubr.f32.gmra.mxu0 %v385
        %v487 = vpop.f32.mrf.mxu0
        %v488 = vadd.f32 %v420, %v487
        %v489 = vpop.f32.mrf.mxu0
        %490 = vmatprep.mubr.f32.mxu0 0.0
        %491 = vmatmul.mubr.f32.gmra.mxu0 %v386
        %v492 = vpop.f32.mrf.mxu0
        %v493 = vadd.f32 %v420, %v492
        %v494 = vpop.f32.mrf.mxu0
        %495 = vmatprep.mubr.f32.mxu0 0.0
        %496 = vmatmul.mubr.f32.gmra.mxu0 %v387
        %v497 = vpop.f32.mrf.mxu0
        %v498 = vadd.f32 %v420, %v497
        %v499 = vpop.f32.mrf.mxu0
        %500 = vmatprep.mubr.f32.mxu0 0.0
        %501 = vmatmul.mubr.f32.gmra.mxu0 %v388
        %v502 = vpop.f32.mrf.mxu0
        %v503 = vadd.f32 %v420, %v502
        %v504 = vpop.f32.mrf.mxu0
        %505 = vmatprep.mubr.f32.mxu0 0.0
        %506 = vmatmul.mubr.f32.gmra.mxu0 %v389
        %v507 = vpop.f32.mrf.mxu0
        %v508 = vadd.f32 %v420, %v507
        %v509 = vpop.f32.mrf.mxu0
        %510 = vmatprep.mubr.f32.mxu0 0.0
        %511 = vmatmul.mubr.f32.gmra.mxu0 %v390
        %v512 = vpop.f32.mrf.mxu0
        %v513 = vadd.f32 %v420, %v512
        %v514 = vpop.f32.mrf.mxu0
        %515 = vmatprep.mubr.f32.mxu0 0.0
        %516 = vmatmul.mubr.f32.gmra.mxu0 %v391
        %v517 = vpop.f32.mrf.mxu0
        %v518 = vadd.f32 %v420, %v517
        %v519 = vpop.f32.mrf.mxu0
        %520 = vmatprep.mubr.f32.mxu0 0.0
        %521 = vmatmul.mubr.f32.gmra.mxu0 %v392
        %v522 = vpop.f32.mrf.mxu0
        %v523 = vadd.f32 %v420, %v522
        %v524 = vpop.f32.mrf.mxu0
        %525 = vmatprep.mubr.f32.mxu0 0.0
        %526 = vmatmul.mubr.f32.gmra.mxu0 %v393
        %v527 = vpop.f32.mrf.mxu0
        %v528 = vadd.f32 %v420, %v527
        %v529 = vpop.f32.mrf.mxu0
        %530 = vmatprep.mubr.f32.mxu0 0.0
        %531 = vmatmul.mubr.f32.gmra.mxu0 %v394
        %v532 = vpop.f32.mrf.mxu0
        %v533 = vadd.f32 %v420, %v532
        %v534 = vpop.f32.mrf.mxu0
        %535 = vmatprep.mubr.f32.mxu0 0.0
        %536 = vmatmul.mubr.f32.gmra.mxu0 %v395
        %v537 = vpop.f32.mrf.mxu0
        %v538 = vadd.f32 %v420, %v537
        %v539 = vpop.f32.mrf.mxu0
        %540 = vmatprep.mubr.f32.mxu0 0.0
        %541 = vmatmul.mubr.f32.gmra.mxu0 %v396
        %v542 = vpop.f32.mrf.mxu0
        %v543 = vadd.f32 %v420, %v542
        %v544 = vpop.f32.mrf.mxu0
        %545 = vmatprep.mubr.f32.mxu0 0.0
        %546 = vmatmul.mubr.f32.gmra.mxu0 %v397
        %v547 = vpop.f32.mrf.mxu0
        %v548 = vadd.f32 %v420, %v547
        %v549 = vpop.f32.mrf.mxu0
        %550 = vmatprep.mubr.f32.mxu0 0.0
        %551 = vmatmul.mubr.f32.gmra.mxu0 %v398
        %v552 = vpop.f32.mrf.mxu0
        %v553 = vadd.f32 %v420, %v552
        %v554 = vpop.f32.mrf.mxu0
        %555 = vmatprep.mubr.f32.mxu0 0.0
        %556 = vmatmul.mubr.f32.gmra.mxu0 %v399
        %v557 = vpop.f32.mrf.mxu0
        %v558 = vadd.f32 %v420, %v557
        %v559 = vpop.f32.mrf.mxu0
        %560 = vmatprep.mubr.f32.mxu0 0.0
        %561 = vmatmul.mubr.f32.gmra.mxu0 %v400
        %v562 = vpop.f32.mrf.mxu0
        %v563 = vadd.f32 %v420, %v562
        %v564 = vpop.f32.mrf.mxu0
        %565 = vdwg.mxu0
        %v566 = vld [vmem:[#allocation8] sm:$0xff]
        %v567 = vld [vmem:[#allocation8 + $0x8] sm:$0xff]
        %v568 = vld [vmem:[#allocation8 + $0x10] sm:$0xff]
        %v569 = vld [vmem:[#allocation8 + $0x18] sm:$0xff]
        %v570 = vld [vmem:[#allocation8 + $0x20] sm:$0xff]
        %v571 = vld [vmem:[#allocation8 + $0x28] sm:$0xff]
        %v572 = vld [vmem:[#allocation8 + $0x30] sm:$0xff]
        %v573 = vld [vmem:[#allocation8 + $0x38] sm:$0xff]
        %v574 = vld [vmem:[#allocation8 + $0x40] sm:$0xff]
        %v575 = vld [vmem:[#allocation8 + $0x48] sm:$0xff]
        %v576 = vld [vmem:[#allocation8 + $0x50] sm:$0xff]
        %v577 = vld [vmem:[#allocation8 + $0x58] sm:$0xff]
        %v578 = vld [vmem:[#allocation8 + $0x60] sm:$0xff]
        %v579 = vld [vmem:[#allocation8 + $0x68] sm:$0xff]
        %v580 = vld [vmem:[#allocation8 + $0x70] sm:$0xff]
        %v581 = vld [vmem:[#allocation8 + $0x78] sm:$0xff]
        %v582 = vlaneseq
        %v583 = vshrl.u32 %v582, 7
        %v584 = vsub.s32 1, %v583
        %v585 = vrot.slane %v384, %v584
        %586 = vmatprep.subr.mxu0 0.0
        %587 = vmatpush1.msra.mxu0 %v581
        %588 = vmatprep.subr.mxu0 0.0
        %589 = vmatpush1.msra.mxu0 %v580
        %590 = vmatprep.subr.mxu0 0.0
        %591 = vmatpush1.msra.mxu0 %v579
        %592 = vmatprep.subr.mxu0 0.0
        %593 = vmatpush1.msra.mxu0 %v578
        %594 = vmatprep.subr.mxu0 0.0
        %595 = vmatpush1.msra.mxu0 %v577
        %596 = vmatprep.subr.mxu0 0.0
        %597 = vmatpush1.msra.mxu0 %v576
        %598 = vmatprep.subr.mxu0 0.0
        %599 = vmatpush1.msra.mxu0 %v575
        %600 = vmatprep.subr.mxu0 0.0
        %601 = vmatpush1.msra.mxu0 %v574
        %602 = vmatprep.subr.mxu0 0.0
        %603 = vmatpush1.msra.mxu0 %v573
        %604 = vmatprep.subr.mxu0 0.0
        %605 = vmatpush1.msra.mxu0 %v572
        %606 = vmatprep.subr.mxu0 0.0
        %607 = vmatpush1.msra.mxu0 %v571
        %608 = vmatprep.subr.mxu0 0.0
        %609 = vmatpush1.msra.mxu0 %v570
        %610 = vmatprep.subr.mxu0 0.0
        %611 = vmatpush1.msra.mxu0 %v569
        %612 = vmatprep.subr.mxu0 0.0
        %613 = vmatpush1.msra.mxu0 %v568
        %614 = vmatprep.subr.mxu0 0.0
        %615 = vmatpush1.msra.mxu0 %v567
        %616 = vmatprep.subr.mxu0 0.0
        %617 = vmatpush1.msra.mxu0 %v566
        %618 = vmatprep.subr.mxu0 0.0
        %619 = vmatpush2.msra.mxu0 0.0
        %620 = vmatprep.subr.mxu0 0.0
        %621 = vmatpush2.msra.mxu0 0.0
        %622 = vmatprep.subr.mxu0 0.0
        %623 = vmatpush2.msra.mxu0 0.0
        %624 = vmatprep.subr.mxu0 0.0
        %625 = vmatpush2.msra.mxu0 0.0
        %626 = vmatprep.subr.mxu0 0.0
        %627 = vmatpush2.msra.mxu0 0.0
        %628 = vmatprep.subr.mxu0 0.0
        %629 = vmatpush2.msra.mxu0 0.0
        %630 = vmatprep.subr.mxu0 0.0
        %631 = vmatpush2.msra.mxu0 0.0
        %632 = vmatprep.subr.mxu0 0.0
        %633 = vmatpush2.msra.mxu0 0.0
        %634 = vmatprep.subr.mxu0 0.0
        %635 = vmatpush2.msra.mxu0 0.0
        %636 = vmatprep.subr.mxu0 0.0
        %637 = vmatpush2.msra.mxu0 0.0
        %638 = vmatprep.subr.mxu0 0.0
        %639 = vmatpush2.msra.mxu0 0.0
        %640 = vmatprep.subr.mxu0 0.0
        %641 = vmatpush2.msra.mxu0 0.0
        %642 = vmatprep.subr.mxu0 0.0
        %643 = vmatpush2.msra.mxu0 0.0
        %644 = vmatprep.subr.mxu0 0.0
        %645 = vmatpush2.msra.mxu0 0.0
        %646 = vmatprep.subr.mxu0 0.0
        %647 = vmatpush2.msra.mxu0 0.0
        %648 = vmatprep.subr.mxu0 0.0
        %649 = vmatpush2.msra.mxu0 0.0
        %650 = vmatprep.mubr.f32.mxu0 0.0
        %651 = vmatmul.mubr.f32.gmra.mxu0 %v488
        %v652 = vpop.f32.mrf.mxu0
        %v653 = vadd.f32 %v585, %v652
        %v654 = vpop.f32.mrf.mxu0
        %655 = vmatprep.mubr.f32.mxu0 0.0
        %656 = vmatmul.mubr.f32.gmra.mxu0 %v493
        %v657 = vpop.f32.mrf.mxu0
        %v658 = vadd.f32 %v585, %v657
        %v659 = vpop.f32.mrf.mxu0
        %660 = vmatprep.mubr.f32.mxu0 0.0
        %661 = vmatmul.mubr.f32.gmra.mxu0 %v498
        %v662 = vpop.f32.mrf.mxu0
        %v663 = vadd.f32 %v585, %v662
        %v664 = vpop.f32.mrf.mxu0
        %665 = vmatprep.mubr.f32.mxu0 0.0
        %666 = vmatmul.mubr.f32.gmra.mxu0 %v503
        %v667 = vpop.f32.mrf.mxu0
        %v668 = vadd.f32 %v585, %v667
        %v669 = vpop.f32.mrf.mxu0
        %670 = vmatprep.mubr.f32.mxu0 0.0
        %671 = vmatmul.mubr.f32.gmra.mxu0 %v508
        %v672 = vpop.f32.mrf.mxu0
        %v673 = vadd.f32 %v585, %v672
        %v674 = vpop.f32.mrf.mxu0
        %675 = vmatprep.mubr.f32.mxu0 0.0
        %676 = vmatmul.mubr.f32.gmra.mxu0 %v513
        %v677 = vpop.f32.mrf.mxu0
        %v678 = vadd.f32 %v585, %v677
        %v679 = vpop.f32.mrf.mxu0
        %680 = vmatprep.mubr.f32.mxu0 0.0
        %681 = vmatmul.mubr.f32.gmra.mxu0 %v518
        %v682 = vpop.f32.mrf.mxu0
        %v683 = vadd.f32 %v585, %v682
        %v684 = vpop.f32.mrf.mxu0
        %685 = vmatprep.mubr.f32.mxu0 0.0
        %686 = vmatmul.mubr.f32.gmra.mxu0 %v523
        %v687 = vpop.f32.mrf.mxu0
        %v688 = vadd.f32 %v585, %v687
        %v689 = vpop.f32.mrf.mxu0
        %690 = vmatprep.mubr.f32.mxu0 0.0
        %691 = vmatmul.mubr.f32.gmra.mxu0 %v528
        %v692 = vpop.f32.mrf.mxu0
        %v693 = vadd.f32 %v585, %v692
        %v694 = vpop.f32.mrf.mxu0
        %695 = vmatprep.mubr.f32.mxu0 0.0
        %696 = vmatmul.mubr.f32.gmra.mxu0 %v533
        %v697 = vpop.f32.mrf.mxu0
        %v698 = vadd.f32 %v585, %v697
        %v699 = vpop.f32.mrf.mxu0
        %700 = vmatprep.mubr.f32.mxu0 0.0
        %701 = vmatmul.mubr.f32.gmra.mxu0 %v538
        %v702 = vpop.f32.mrf.mxu0
        %v703 = vadd.f32 %v585, %v702
        %v704 = vpop.f32.mrf.mxu0
        %705 = vmatprep.mubr.f32.mxu0 0.0
        %706 = vmatmul.mubr.f32.gmra.mxu0 %v543
        %v707 = vpop.f32.mrf.mxu0
        %v708 = vadd.f32 %v585, %v707
        %v709 = vpop.f32.mrf.mxu0
        %710 = vmatprep.mubr.f32.mxu0 0.0
        %711 = vmatmul.mubr.f32.gmra.mxu0 %v548
        %v712 = vpop.f32.mrf.mxu0
        %v713 = vadd.f32 %v585, %v712
        %v714 = vpop.f32.mrf.mxu0
        %715 = vmatprep.mubr.f32.mxu0 0.0
        %716 = vmatmul.mubr.f32.gmra.mxu0 %v553
        %v717 = vpop.f32.mrf.mxu0
        %v718 = vadd.f32 %v585, %v717
        %v719 = vpop.f32.mrf.mxu0
        %720 = vmatprep.mubr.f32.mxu0 0.0
        %721 = vmatmul.mubr.f32.gmra.mxu0 %v558
        %v722 = vpop.f32.mrf.mxu0
        %v723 = vadd.f32 %v585, %v722
        %v724 = vpop.f32.mrf.mxu0
        %725 = vmatprep.mubr.f32.mxu0 0.0
        %726 = vmatmul.mubr.f32.gmra.mxu0 %v563
        %v727 = vpop.f32.mrf.mxu0
        %v728 = vadd.f32 %v585, %v727
        %v729 = vpop.f32.mrf.mxu0
        %730 = vdwg.mxu0
        %v731 = vtanh.pop %v653
        %v732 = vtanh.pop %v658
        %v733 = vtanh.pop %v663
        %v734 = vtanh.pop %v668
        %v735 = vtanh.pop %v673
        %v736 = vtanh.pop %v678
        %v737 = vtanh.pop %v683
        %v738 = vtanh.pop %v688
        %v739 = vtanh.pop %v693
        %v740 = vtanh.pop %v698
        %v741 = vtanh.pop %v703
        %v742 = vtanh.pop %v708
        %v743 = vtanh.pop %v713
        %v744 = vtanh.pop %v718
        %v745 = vtanh.pop %v723
        %v746 = vtanh.pop %v728
        %v747 = vld [vmem:[#allocation10] sm:$0xff]
        %v748 = vld [vmem:[#allocation10 + $0x8] sm:$0xff]
        %v749 = vld [vmem:[#allocation10 + $0x10] sm:$0xff]
        %v750 = vld [vmem:[#allocation10 + $0x18] sm:$0xff]
        %v751 = vld [vmem:[#allocation10 + $0x20] sm:$0xff]
        %v752 = vld [vmem:[#allocation10 + $0x28] sm:$0xff]
        %v753 = vld [vmem:[#allocation10 + $0x30] sm:$0xff]
        %v754 = vld [vmem:[#allocation10 + $0x38] sm:$0xff]
        %v755 = vld [vmem:[#allocation10 + $0x40] sm:$0xff]
        %v756 = vld [vmem:[#allocation10 + $0x48] sm:$0xff]
        %v757 = vld [vmem:[#allocation10 + $0x50] sm:$0xff]
        %v758 = vld [vmem:[#allocation10 + $0x58] sm:$0xff]
        %v759 = vld [vmem:[#allocation10 + $0x60] sm:$0xff]
        %v760 = vld [vmem:[#allocation10 + $0x68] sm:$0xff]
        %v761 = vld [vmem:[#allocation10 + $0x70] sm:$0xff]
        %v762 = vld [vmem:[#allocation10 + $0x78] sm:$0xff]
        %v763 = vlaneseq
        %v764 = vshrl.u32 %v763, 7
        %v765 = vsub.s32 2, %v764
        %v766 = vrot.slane %v384, %v765
        %767 = vmatprep.subr.mxu0 0.0
        %768 = vmatpush1.msra.mxu0 %v762
        %769 = vmatprep.subr.mxu0 0.0
        %770 = vmatpush1.msra.mxu0 %v761
        %771 = vmatprep.subr.mxu0 0.0
        %772 = vmatpush1.msra.mxu0 %v760
        %773 = vmatprep.subr.mxu0 0.0
        %774 = vmatpush1.msra.mxu0 %v759
        %775 = vmatprep.subr.mxu0 0.0
        %776 = vmatpush1.msra.mxu0 %v758
        %777 = vmatprep.subr.mxu0 0.0
        %778 = vmatpush1.msra.mxu0 %v757
        %779 = vmatprep.subr.mxu0 0.0
        %780 = vmatpush1.msra.mxu0 %v756
        %781 = vmatprep.subr.mxu0 0.0
        %782 = vmatpush1.msra.mxu0 %v755
        %783 = vmatprep.subr.mxu0 0.0
        %784 = vmatpush1.msra.mxu0 %v754
        %785 = vmatprep.subr.mxu0 0.0
        %786 = vmatpush1.msra.mxu0 %v753
        %787 = vmatprep.subr.mxu0 0.0
        %788 = vmatpush1.msra.mxu0 %v752
        %789 = vmatprep.subr.mxu0 0.0
        %790 = vmatpush1.msra.mxu0 %v751
        %791 = vmatprep.subr.mxu0 0.0
        %792 = vmatpush1.msra.mxu0 %v750
        %793 = vmatprep.subr.mxu0 0.0
        %794 = vmatpush1.msra.mxu0 %v749
        %795 = vmatprep.subr.mxu0 0.0
        %796 = vmatpush1.msra.mxu0 %v748
        %797 = vmatprep.subr.mxu0 0.0
        %798 = vmatpush1.msra.mxu0 %v747
        %799 = vmatprep.subr.mxu0 0.0
        %800 = vmatpush2.msra.mxu0 0.0
        %801 = vmatprep.subr.mxu0 0.0
        %802 = vmatpush2.msra.mxu0 0.0
        %803 = vmatprep.subr.mxu0 0.0
        %804 = vmatpush2.msra.mxu0 0.0
        %805 = vmatprep.subr.mxu0 0.0
        %806 = vmatpush2.msra.mxu0 0.0
        %807 = vmatprep.subr.mxu0 0.0
        %808 = vmatpush2.msra.mxu0 0.0
        %809 = vmatprep.subr.mxu0 0.0
        %810 = vmatpush2.msra.mxu0 0.0
        %811 = vmatprep.subr.mxu0 0.0
        %812 = vmatpush2.msra.mxu0 0.0
        %813 = vmatprep.subr.mxu0 0.0
        %814 = vmatpush2.msra.mxu0 0.0
        %815 = vmatprep.subr.mxu0 0.0
        %816 = vmatpush2.msra.mxu0 0.0
        %817 = vmatprep.subr.mxu0 0.0
        %818 = vmatpush2.msra.mxu0 0.0
        %819 = vmatprep.subr.mxu0 0.0
        %820 = vmatpush2.msra.mxu0 0.0
        %821 = vmatprep.subr.mxu0 0.0
        %822 = vmatpush2.msra.mxu0 0.0
        %823 = vmatprep.subr.mxu0 0.0
        %824 = vmatpush2.msra.mxu0 0.0
        %825 = vmatprep.subr.mxu0 0.0
        %826 = vmatpush2.msra.mxu0 0.0
        %827 = vmatprep.subr.mxu0 0.0
        %828 = vmatpush2.msra.mxu0 0.0
        %829 = vmatprep.subr.mxu0 0.0
        %830 = vmatpush2.msra.mxu0 0.0
        %831 = vmatprep.mubr.f32.mxu0 0.0
        %832 = vmatmul.mubr.f32.gmra.mxu0 %v731
        %v833 = vpop.f32.mrf.mxu0
        %v834 = vadd.f32 %v766, %v833
        %v835 = vpop.f32.mrf.mxu0
        %836 = vmatprep.mubr.f32.mxu0 0.0
        %837 = vmatmul.mubr.f32.gmra.mxu0 %v732
        %v838 = vpop.f32.mrf.mxu0
        %v839 = vadd.f32 %v766, %v838
        %v840 = vpop.f32.mrf.mxu0
        %841 = vmatprep.mubr.f32.mxu0 0.0
        %842 = vmatmul.mubr.f32.gmra.mxu0 %v733
        %v843 = vpop.f32.mrf.mxu0
        %v844 = vadd.f32 %v766, %v843
        %v845 = vpop.f32.mrf.mxu0
        %846 = vmatprep.mubr.f32.mxu0 0.0
        %847 = vmatmul.mubr.f32.gmra.mxu0 %v734
        %v848 = vpop.f32.mrf.mxu0
        %v849 = vadd.f32 %v766, %v848
        %v850 = vpop.f32.mrf.mxu0
        %851 = vmatprep.mubr.f32.mxu0 0.0
        %852 = vmatmul.mubr.f32.gmra.mxu0 %v735
        %v853 = vpop.f32.mrf.mxu0
        %v854 = vadd.f32 %v766, %v853
        %v855 = vpop.f32.mrf.mxu0
        %856 = vmatprep.mubr.f32.mxu0 0.0
        %857 = vmatmul.mubr.f32.gmra.mxu0 %v736
        %v858 = vpop.f32.mrf.mxu0
        %v859 = vadd.f32 %v766, %v858
        %v860 = vpop.f32.mrf.mxu0
        %861 = vmatprep.mubr.f32.mxu0 0.0
        %862 = vmatmul.mubr.f32.gmra.mxu0 %v737
        %v863 = vpop.f32.mrf.mxu0
        %v864 = vadd.f32 %v766, %v863
        %v865 = vpop.f32.mrf.mxu0
        %866 = vmatprep.mubr.f32.mxu0 0.0
        %867 = vmatmul.mubr.f32.gmra.mxu0 %v738
        %v868 = vpop.f32.mrf.mxu0
        %v869 = vadd.f32 %v766, %v868
        %v870 = vpop.f32.mrf.mxu0
        %871 = vmatprep.mubr.f32.mxu0 0.0
        %872 = vmatmul.mubr.f32.gmra.mxu0 %v739
        %v873 = vpop.f32.mrf.mxu0
        %v874 = vadd.f32 %v766, %v873
        %v875 = vpop.f32.mrf.mxu0
        %876 = vmatprep.mubr.f32.mxu0 0.0
        %877 = vmatmul.mubr.f32.gmra.mxu0 %v740
        %v878 = vpop.f32.mrf.mxu0
        %v879 = vadd.f32 %v766, %v878
        %v880 = vpop.f32.mrf.mxu0
        %881 = vmatprep.mubr.f32.mxu0 0.0
        %882 = vmatmul.mubr.f32.gmra.mxu0 %v741
        %v883 = vpop.f32.mrf.mxu0
        %v884 = vadd.f32 %v766, %v883
        %v885 = vpop.f32.mrf.mxu0
        %886 = vmatprep.mubr.f32.mxu0 0.0
        %887 = vmatmul.mubr.f32.gmra.mxu0 %v742
        %v888 = vpop.f32.mrf.mxu0
        %v889 = vadd.f32 %v766, %v888
        %v890 = vpop.f32.mrf.mxu0
        %891 = vmatprep.mubr.f32.mxu0 0.0
        %892 = vmatmul.mubr.f32.gmra.mxu0 %v743
        %v893 = vpop.f32.mrf.mxu0
        %v894 = vadd.f32 %v766, %v893
        %v895 = vpop.f32.mrf.mxu0
        %896 = vmatprep.mubr.f32.mxu0 0.0
        %897 = vmatmul.mubr.f32.gmra.mxu0 %v744
        %v898 = vpop.f32.mrf.mxu0
        %v899 = vadd.f32 %v766, %v898
        %v900 = vpop.f32.mrf.mxu0
        %901 = vmatprep.mubr.f32.mxu0 0.0
        %902 = vmatmul.mubr.f32.gmra.mxu0 %v745
        %v903 = vpop.f32.mrf.mxu0
        %v904 = vadd.f32 %v766, %v903
        %v905 = vpop.f32.mrf.mxu0
        %906 = vmatprep.mubr.f32.mxu0 0.0
        %907 = vmatmul.mubr.f32.gmra.mxu0 %v746
        %v908 = vpop.f32.mrf.mxu0
        %v909 = vadd.f32 %v766, %v908
        %v910 = vpop.f32.mrf.mxu0
        %911 = vdwg.mxu0
        %v912 = vld [vmem:[#allocation11] sm:$0xff]
        %v913 = vld [vmem:[#allocation11 + $0x8] sm:$0xff]
        %v914 = vld [vmem:[#allocation11 + $0x10] sm:$0xff]
        %v915 = vld [vmem:[#allocation11 + $0x18] sm:$0xff]
        %v916 = vld [vmem:[#allocation11 + $0x20] sm:$0xff]
        %v917 = vld [vmem:[#allocation11 + $0x28] sm:$0xff]
        %v918 = vld [vmem:[#allocation11 + $0x30] sm:$0xff]
        %v919 = vld [vmem:[#allocation11 + $0x38] sm:$0xff]
        %v920 = vld [vmem:[#allocation11 + $0x40] sm:$0xff]
        %v921 = vld [vmem:[#allocation11 + $0x48] sm:$0xff]
        %v922 = vld [vmem:[#allocation11 + $0x50] sm:$0xff]
        %v923 = vld [vmem:[#allocation11 + $0x58] sm:$0xff]
        %v924 = vld [vmem:[#allocation11 + $0x60] sm:$0xff]
        %v925 = vld [vmem:[#allocation11 + $0x68] sm:$0xff]
        %v926 = vld [vmem:[#allocation11 + $0x70] sm:$0xff]
        %v927 = vld [vmem:[#allocation11 + $0x78] sm:$0xff]
        %v928 = vlaneseq
        %v929 = vshrl.u32 %v928, 7
        %v930 = vsub.s32 3, %v929
        %v931 = vrot.slane %v384, %v930
        %932 = vmatprep.subr.mxu0 0.0
        %933 = vmatpush1.msra.mxu0 %v927
        %934 = vmatprep.subr.mxu0 0.0
        %935 = vmatpush1.msra.mxu0 %v926
        %936 = vmatprep.subr.mxu0 0.0
        %937 = vmatpush1.msra.mxu0 %v925
        %938 = vmatprep.subr.mxu0 0.0
        %939 = vmatpush1.msra.mxu0 %v924
        %940 = vmatprep.subr.mxu0 0.0
        %941 = vmatpush1.msra.mxu0 %v923
        %942 = vmatprep.subr.mxu0 0.0
        %943 = vmatpush1.msra.mxu0 %v922
        %944 = vmatprep.subr.mxu0 0.0
        %945 = vmatpush1.msra.mxu0 %v921
        %946 = vmatprep.subr.mxu0 0.0
        %947 = vmatpush1.msra.mxu0 %v920
        %948 = vmatprep.subr.mxu0 0.0
        %949 = vmatpush1.msra.mxu0 %v919
        %950 = vmatprep.subr.mxu0 0.0
        %951 = vmatpush1.msra.mxu0 %v918
        %952 = vmatprep.subr.mxu0 0.0
        %953 = vmatpush1.msra.mxu0 %v917
        %954 = vmatprep.subr.mxu0 0.0
        %955 = vmatpush1.msra.mxu0 %v916
        %956 = vmatprep.subr.mxu0 0.0
        %957 = vmatpush1.msra.mxu0 %v915
        %958 = vmatprep.subr.mxu0 0.0
        %959 = vmatpush1.msra.mxu0 %v914
        %960 = vmatprep.subr.mxu0 0.0
        %961 = vmatpush1.msra.mxu0 %v913
        %962 = vmatprep.subr.mxu0 0.0
        %963 = vmatpush1.msra.mxu0 %v912
        %964 = vmatprep.subr.mxu0 0.0
        %965 = vmatpush2.msra.mxu0 0.0
        %966 = vmatprep.subr.mxu0 0.0
        %967 = vmatpush2.msra.mxu0 0.0
        %968 = vmatprep.subr.mxu0 0.0
        %969 = vmatpush2.msra.mxu0 0.0
        %970 = vmatprep.subr.mxu0 0.0
        %971 = vmatpush2.msra.mxu0 0.0
        %972 = vmatprep.subr.mxu0 0.0
        %973 = vmatpush2.msra.mxu0 0.0
        %974 = vmatprep.subr.mxu0 0.0
        %975 = vmatpush2.msra.mxu0 0.0
        %976 = vmatprep.subr.mxu0 0.0
        %977 = vmatpush2.msra.mxu0 0.0
        %978 = vmatprep.subr.mxu0 0.0
        %979 = vmatpush2.msra.mxu0 0.0
        %980 = vmatprep.subr.mxu0 0.0
        %981 = vmatpush2.msra.mxu0 0.0
        %982 = vmatprep.subr.mxu0 0.0
        %983 = vmatpush2.msra.mxu0 0.0
        %984 = vmatprep.subr.mxu0 0.0
        %985 = vmatpush2.msra.mxu0 0.0
        %986 = vmatprep.subr.mxu0 0.0
        %987 = vmatpush2.msra.mxu0 0.0
        %988 = vmatprep.subr.mxu0 0.0
        %989 = vmatpush2.msra.mxu0 0.0
        %990 = vmatprep.subr.mxu0 0.0
        %991 = vmatpush2.msra.mxu0 0.0
        %992 = vmatprep.subr.mxu0 0.0
        %993 = vmatpush2.msra.mxu0 0.0
        %994 = vmatprep.subr.mxu0 0.0
        %995 = vmatpush2.msra.mxu0 0.0
        %996 = vmatprep.mubr.f32.mxu0 0.0
        %997 = vmatmul.mubr.f32.gmra.mxu0 %v488
        %v998 = vpop.f32.mrf.mxu0
        %v999 = vadd.f32 %v931, %v998
        %v1000 = vpop.f32.mrf.mxu0
        %1001 = vmatprep.mubr.f32.mxu0 0.0
        %1002 = vmatmul.mubr.f32.gmra.mxu0 %v493
        %v1003 = vpop.f32.mrf.mxu0
        %v1004 = vadd.f32 %v931, %v1003
        %v1005 = vpop.f32.mrf.mxu0
        %1006 = vmatprep.mubr.f32.mxu0 0.0
        %1007 = vmatmul.mubr.f32.gmra.mxu0 %v498
        %v1008 = vpop.f32.mrf.mxu0
        %v1009 = vadd.f32 %v931, %v1008
        %v1010 = vpop.f32.mrf.mxu0
        %1011 = vmatprep.mubr.f32.mxu0 0.0
        %1012 = vmatmul.mubr.f32.gmra.mxu0 %v503
        %v1013 = vpop.f32.mrf.mxu0
        %v1014 = vadd.f32 %v931, %v1013
        %v1015 = vpop.f32.mrf.mxu0
        %1016 = vmatprep.mubr.f32.mxu0 0.0
        %1017 = vmatmul.mubr.f32.gmra.mxu0 %v508
        %v1018 = vpop.f32.mrf.mxu0
        %v1019 = vadd.f32 %v931, %v1018
        %v1020 = vpop.f32.mrf.mxu0
        %1021 = vmatprep.mubr.f32.mxu0 0.0
        %1022 = vmatmul.mubr.f32.gmra.mxu0 %v513
        %v1023 = vpop.f32.mrf.mxu0
        %v1024 = vadd.f32 %v931, %v1023
        %v1025 = vpop.f32.mrf.mxu0
        %1026 = vmatprep.mubr.f32.mxu0 0.0
        %1027 = vmatmul.mubr.f32.gmra.mxu0 %v518
        %v1028 = vpop.f32.mrf.mxu0
        %v1029 = vadd.f32 %v931, %v1028
        %v1030 = vpop.f32.mrf.mxu0
        %1031 = vmatprep.mubr.f32.mxu0 0.0
        %1032 = vmatmul.mubr.f32.gmra.mxu0 %v523
        %v1033 = vpop.f32.mrf.mxu0
        %v1034 = vadd.f32 %v931, %v1033
        %v1035 = vpop.f32.mrf.mxu0
        %1036 = vmatprep.mubr.f32.mxu0 0.0
        %1037 = vmatmul.mubr.f32.gmra.mxu0 %v528
        %v1038 = vpop.f32.mrf.mxu0
        %v1039 = vadd.f32 %v931, %v1038
        %v1040 = vpop.f32.mrf.mxu0
        %1041 = vmatprep.mubr.f32.mxu0 0.0
        %1042 = vmatmul.mubr.f32.gmra.mxu0 %v533
        %v1043 = vpop.f32.mrf.mxu0
        %v1044 = vadd.f32 %v931, %v1043
        %v1045 = vpop.f32.mrf.mxu0
        %1046 = vmatprep.mubr.f32.mxu0 0.0
        %1047 = vmatmul.mubr.f32.gmra.mxu0 %v538
        %v1048 = vpop.f32.mrf.mxu0
        %v1049 = vadd.f32 %v931, %v1048
        %v1050 = vpop.f32.mrf.mxu0
        %1051 = vmatprep.mubr.f32.mxu0 0.0
        %1052 = vmatmul.mubr.f32.gmra.mxu0 %v543
        %v1053 = vpop.f32.mrf.mxu0
        %v1054 = vadd.f32 %v931, %v1053
        %v1055 = vpop.f32.mrf.mxu0
        %1056 = vmatprep.mubr.f32.mxu0 0.0
        %1057 = vmatmul.mubr.f32.gmra.mxu0 %v548
        %v1058 = vpop.f32.mrf.mxu0
        %v1059 = vadd.f32 %v931, %v1058
        %v1060 = vpop.f32.mrf.mxu0
        %1061 = vmatprep.mubr.f32.mxu0 0.0
        %1062 = vmatmul.mubr.f32.gmra.mxu0 %v553
        %v1063 = vpop.f32.mrf.mxu0
        %v1064 = vadd.f32 %v931, %v1063
        %v1065 = vpop.f32.mrf.mxu0
        %1066 = vmatprep.mubr.f32.mxu0 0.0
        %1067 = vmatmul.mubr.f32.gmra.mxu0 %v558
        %v1068 = vpop.f32.mrf.mxu0
        %v1069 = vadd.f32 %v931, %v1068
        %v1070 = vpop.f32.mrf.mxu0
        %1071 = vmatprep.mubr.f32.mxu0 0.0
        %1072 = vmatmul.mubr.f32.gmra.mxu0 %v563
        %v1073 = vpop.f32.mrf.mxu0
        %v1074 = vadd.f32 %v931, %v1073
        %v1075 = vpop.f32.mrf.mxu0
        %1076 = vdwg.mxu0
        %v1077 = vtanh.pop %v999
        %v1078 = vtanh.pop %v1004
        %v1079 = vtanh.pop %v1009
        %v1080 = vtanh.pop %v1014
        %v1081 = vtanh.pop %v1019
        %v1082 = vtanh.pop %v1024
        %v1083 = vtanh.pop %v1029
        %v1084 = vtanh.pop %v1034
        %v1085 = vtanh.pop %v1039
        %v1086 = vtanh.pop %v1044
        %v1087 = vtanh.pop %v1049
        %v1088 = vtanh.pop %v1054
        %v1089 = vtanh.pop %v1059
        %v1090 = vtanh.pop %v1064
        %v1091 = vtanh.pop %v1069
        %v1092 = vtanh.pop %v1074
        %v1093 = vadd.f32 %v1077, %v834
        %v1094 = vadd.f32 %v1078, %v839
        %v1095 = vadd.f32 %v1079, %v844
        %v1096 = vadd.f32 %v1080, %v849
        %v1097 = vadd.f32 %v1081, %v854
        %v1098 = vadd.f32 %v1082, %v859
        %v1099 = vadd.f32 %v1083, %v864
        %v1100 = vadd.f32 %v1084, %v869
        %v1101 = vadd.f32 %v1085, %v874
        %v1102 = vadd.f32 %v1086, %v879
        %v1103 = vadd.f32 %v1087, %v884
        %v1104 = vadd.f32 %v1088, %v889
        %v1105 = vadd.f32 %v1089, %v894
        %v1106 = vadd.f32 %v1090, %v899
        %v1107 = vadd.f32 %v1091, %v904
        %v1108 = vadd.f32 %v1092, %v909
        %v1109 = vadd.f32 %v1093, %v834
        %v1110 = vadd.f32 %v1094, %v839
        %v1111 = vadd.f32 %v1095, %v844
        %v1112 = vadd.f32 %v1096, %v849
        %v1113 = vadd.f32 %v1097, %v854
        %v1114 = vadd.f32 %v1098, %v859
        %v1115 = vadd.f32 %v1099, %v864
        %v1116 = vadd.f32 %v1100, %v869
        %v1117 = vadd.f32 %v1101, %v874
        %v1118 = vadd.f32 %v1102, %v879
        %v1119 = vadd.f32 %v1103, %v884
        %v1120 = vadd.f32 %v1104, %v889
        %v1121 = vadd.f32 %v1105, %v894
        %v1122 = vadd.f32 %v1106, %v899
        %v1123 = vadd.f32 %v1107, %v904
        %v1124 = vadd.f32 %v1108, %v909
        %v1125 = vld [vmem:[#allocation13] sm:$0xff]
        %v1126 = vld [vmem:[#allocation13 + $0x8] sm:$0xff]
        %v1127 = vld [vmem:[#allocation13 + $0x10] sm:$0xff]
        %v1128 = vld [vmem:[#allocation13 + $0x18] sm:$0xff]
        %v1129 = vld [vmem:[#allocation13 + $0x20] sm:$0xff]
        %v1130 = vld [vmem:[#allocation13 + $0x28] sm:$0xff]
        %v1131 = vld [vmem:[#allocation13 + $0x30] sm:$0xff]
        %v1132 = vld [vmem:[#allocation13 + $0x38] sm:$0xff]
        %v1133 = vld [vmem:[#allocation13 + $0x40] sm:$0xff]
        %v1134 = vld [vmem:[#allocation13 + $0x48] sm:$0xff]
        %v1135 = vld [vmem:[#allocation13 + $0x50] sm:$0xff]
        %v1136 = vld [vmem:[#allocation13 + $0x58] sm:$0xff]
        %v1137 = vld [vmem:[#allocation13 + $0x60] sm:$0xff]
        %v1138 = vld [vmem:[#allocation13 + $0x68] sm:$0xff]
        %v1139 = vld [vmem:[#allocation13 + $0x70] sm:$0xff]
        %v1140 = vld [vmem:[#allocation13 + $0x78] sm:$0xff]
        %v1141 = vlaneseq
        %v1142 = vshrl.u32 %v1141, 7
        %v1143 = vsub.s32 4, %v1142
        %v1144 = vrot.slane %v384, %v1143
        %1145 = vmatprep.subr.mxu0 0.0
        %1146 = vmatpush1.msra.mxu0 %v1140
        %1147 = vmatprep.subr.mxu0 0.0
        %1148 = vmatpush1.msra.mxu0 %v1139
        %1149 = vmatprep.subr.mxu0 0.0
        %1150 = vmatpush1.msra.mxu0 %v1138
        %1151 = vmatprep.subr.mxu0 0.0
        %1152 = vmatpush1.msra.mxu0 %v1137
        %1153 = vmatprep.subr.mxu0 0.0
        %1154 = vmatpush1.msra.mxu0 %v1136
        %1155 = vmatprep.subr.mxu0 0.0
        %1156 = vmatpush1.msra.mxu0 %v1135
        %1157 = vmatprep.subr.mxu0 0.0
        %1158 = vmatpush1.msra.mxu0 %v1134
        %1159 = vmatprep.subr.mxu0 0.0
        %1160 = vmatpush1.msra.mxu0 %v1133
        %1161 = vmatprep.subr.mxu0 0.0
        %1162 = vmatpush1.msra.mxu0 %v1132
        %1163 = vmatprep.subr.mxu0 0.0
        %1164 = vmatpush1.msra.mxu0 %v1131
        %1165 = vmatprep.subr.mxu0 0.0
        %1166 = vmatpush1.msra.mxu0 %v1130
        %1167 = vmatprep.subr.mxu0 0.0
        %1168 = vmatpush1.msra.mxu0 %v1129
        %1169 = vmatprep.subr.mxu0 0.0
        %1170 = vmatpush1.msra.mxu0 %v1128
        %1171 = vmatprep.subr.mxu0 0.0
        %1172 = vmatpush1.msra.mxu0 %v1127
        %1173 = vmatprep.subr.mxu0 0.0
        %1174 = vmatpush1.msra.mxu0 %v1126
        %1175 = vmatprep.subr.mxu0 0.0
        %1176 = vmatpush1.msra.mxu0 %v1125
        %1177 = vmatprep.subr.mxu0 0.0
        %1178 = vmatpush2.msra.mxu0 0.0
        %1179 = vmatprep.subr.mxu0 0.0
        %1180 = vmatpush2.msra.mxu0 0.0
        %1181 = vmatprep.subr.mxu0 0.0
        %1182 = vmatpush2.msra.mxu0 0.0
        %1183 = vmatprep.subr.mxu0 0.0
        %1184 = vmatpush2.msra.mxu0 0.0
        %1185 = vmatprep.subr.mxu0 0.0
        %1186 = vmatpush2.msra.mxu0 0.0
        %1187 = vmatprep.subr.mxu0 0.0
        %1188 = vmatpush2.msra.mxu0 0.0
        %1189 = vmatprep.subr.mxu0 0.0
        %1190 = vmatpush2.msra.mxu0 0.0
        %1191 = vmatprep.subr.mxu0 0.0
        %1192 = vmatpush2.msra.mxu0 0.0
        %1193 = vmatprep.subr.mxu0 0.0
        %1194 = vmatpush2.msra.mxu0 0.0
        %1195 = vmatprep.subr.mxu0 0.0
        %1196 = vmatpush2.msra.mxu0 0.0
        %1197 = vmatprep.subr.mxu0 0.0
        %1198 = vmatpush2.msra.mxu0 0.0
        %1199 = vmatprep.subr.mxu0 0.0
        %1200 = vmatpush2.msra.mxu0 0.0
        %1201 = vmatprep.subr.mxu0 0.0
        %1202 = vmatpush2.msra.mxu0 0.0
        %1203 = vmatprep.subr.mxu0 0.0
        %1204 = vmatpush2.msra.mxu0 0.0
        %1205 = vmatprep.subr.mxu0 0.0
        %1206 = vmatpush2.msra.mxu0 0.0
        %1207 = vmatprep.subr.mxu0 0.0
        %1208 = vmatpush2.msra.mxu0 0.0
        %1209 = vmatprep.mubr.f32.mxu0 0.0
        %1210 = vmatmul.mubr.f32.gmra.mxu0 %v1109
        %v1211 = vpop.f32.mrf.mxu0
        %v1212 = vadd.f32 %v1144, %v1211
        %v1213 = vpop.f32.mrf.mxu0
        %1214 = vmatprep.mubr.f32.mxu0 0.0
        %1215 = vmatmul.mubr.f32.gmra.mxu0 %v1110
        %v1216 = vpop.f32.mrf.mxu0
        %v1217 = vadd.f32 %v1144, %v1216
        %v1218 = vpop.f32.mrf.mxu0
        %1219 = vmatprep.mubr.f32.mxu0 0.0
        %1220 = vmatmul.mubr.f32.gmra.mxu0 %v1111
        %v1221 = vpop.f32.mrf.mxu0
        %v1222 = vadd.f32 %v1144, %v1221
        %v1223 = vpop.f32.mrf.mxu0
        %1224 = vmatprep.mubr.f32.mxu0 0.0
        %1225 = vmatmul.mubr.f32.gmra.mxu0 %v1112
        %v1226 = vpop.f32.mrf.mxu0
        %v1227 = vadd.f32 %v1144, %v1226
        %v1228 = vpop.f32.mrf.mxu0
        %1229 = vmatprep.mubr.f32.mxu0 0.0
        %1230 = vmatmul.mubr.f32.gmra.mxu0 %v1113
        %v1231 = vpop.f32.mrf.mxu0
        %v1232 = vadd.f32 %v1144, %v1231
        %v1233 = vpop.f32.mrf.mxu0
        %1234 = vmatprep.mubr.f32.mxu0 0.0
        %1235 = vmatmul.mubr.f32.gmra.mxu0 %v1114
        %v1236 = vpop.f32.mrf.mxu0
        %v1237 = vadd.f32 %v1144, %v1236
        %v1238 = vpop.f32.mrf.mxu0
        %1239 = vmatprep.mubr.f32.mxu0 0.0
        %1240 = vmatmul.mubr.f32.gmra.mxu0 %v1115
        %v1241 = vpop.f32.mrf.mxu0
        %v1242 = vadd.f32 %v1144, %v1241
        %v1243 = vpop.f32.mrf.mxu0
        %1244 = vmatprep.mubr.f32.mxu0 0.0
        %1245 = vmatmul.mubr.f32.gmra.mxu0 %v1116
        %v1246 = vpop.f32.mrf.mxu0
        %v1247 = vadd.f32 %v1144, %v1246
        %v1248 = vpop.f32.mrf.mxu0
        %1249 = vmatprep.mubr.f32.mxu0 0.0
        %1250 = vmatmul.mubr.f32.gmra.mxu0 %v1117
        %v1251 = vpop.f32.mrf.mxu0
        %v1252 = vadd.f32 %v1144, %v1251
        %v1253 = vpop.f32.mrf.mxu0
        %1254 = vmatprep.mubr.f32.mxu0 0.0
        %1255 = vmatmul.mubr.f32.gmra.mxu0 %v1118
        %v1256 = vpop.f32.mrf.mxu0
        %v1257 = vadd.f32 %v1144, %v1256
        %v1258 = vpop.f32.mrf.mxu0
        %1259 = vmatprep.mubr.f32.mxu0 0.0
        %1260 = vmatmul.mubr.f32.gmra.mxu0 %v1119
        %v1261 = vpop.f32.mrf.mxu0
        %v1262 = vadd.f32 %v1144, %v1261
        %v1263 = vpop.f32.mrf.mxu0
        %1264 = vmatprep.mubr.f32.mxu0 0.0
        %1265 = vmatmul.mubr.f32.gmra.mxu0 %v1120
        %v1266 = vpop.f32.mrf.mxu0
        %v1267 = vadd.f32 %v1144, %v1266
        %v1268 = vpop.f32.mrf.mxu0
        %1269 = vmatprep.mubr.f32.mxu0 0.0
        %1270 = vmatmul.mubr.f32.gmra.mxu0 %v1121
        %v1271 = vpop.f32.mrf.mxu0
        %v1272 = vadd.f32 %v1144, %v1271
        %v1273 = vpop.f32.mrf.mxu0
        %1274 = vmatprep.mubr.f32.mxu0 0.0
        %1275 = vmatmul.mubr.f32.gmra.mxu0 %v1122
        %v1276 = vpop.f32.mrf.mxu0
        %v1277 = vadd.f32 %v1144, %v1276
        %v1278 = vpop.f32.mrf.mxu0
        %1279 = vmatprep.mubr.f32.mxu0 0.0
        %1280 = vmatmul.mubr.f32.gmra.mxu0 %v1123
        %v1281 = vpop.f32.mrf.mxu0
        %v1282 = vadd.f32 %v1144, %v1281
        %v1283 = vpop.f32.mrf.mxu0
        %1284 = vmatprep.mubr.f32.mxu0 0.0
        %1285 = vmatmul.mubr.f32.gmra.mxu0 %v1124
        %v1286 = vpop.f32.mrf.mxu0
        %v1287 = vadd.f32 %v1144, %v1286
        %v1288 = vpop.f32.mrf.mxu0
        %1289 = vdwg.mxu0
        %1290 = vst [vmem:[%s381] sm:$0xff] %v1212
        %1291 = vst [vmem:[%s381 + $0x8] sm:$0xff] %v1217
        %1292 = vst [vmem:[%s381 + $0x10] sm:$0xff] %v1222
        %1293 = vst [vmem:[%s381 + $0x18] sm:$0xff] %v1227
        %1294 = vst [vmem:[%s381 + $0x20] sm:$0xff] %v1232
        %1295 = vst [vmem:[%s381 + $0x28] sm:$0xff] %v1237
        %1296 = vst [vmem:[%s381 + $0x30] sm:$0xff] %v1242
        %1297 = vst [vmem:[%s381 + $0x38] sm:$0xff] %v1247
        %1298 = vst [vmem:[%s381 + $0x40] sm:$0xff] %v1252
        %1299 = vst [vmem:[%s381 + $0x48] sm:$0xff] %v1257
        %1300 = vst [vmem:[%s381 + $0x50] sm:$0xff] %v1262
        %1301 = vst [vmem:[%s381 + $0x58] sm:$0xff] %v1267
        %1302 = vst [vmem:[%s381 + $0x60] sm:$0xff] %v1272
        %1303 = vst [vmem:[%s381 + $0x68] sm:$0xff] %v1277
        %1304 = vst [vmem:[%s381 + $0x70] sm:$0xff] %v1282
        %1305 = vst [vmem:[%s381 + $0x78] sm:$0xff] %v1287
        %s1306 = sand.u32 %s187, 1
        %s1307 = scalar_lea.sflag [#allocation4], %s1306
        %s1308 = sand.u32 %s187, 1
        %s1309 = smul.addr %s1308, 128
        %s1310 = scalar_lea.vmem [#allocation14], %s1309
        // Predicated region
        $region77: #{tpu_custom_call.1} parent=47 // pred_check
          %p1311 = pneg %p197
        $region78: #{tpu_custom_call.1} parent=47 // pred_check_branch
          %1313 = sbr.rel (%p1311) target = $region80
        $region79: #{tpu_custom_call.1} parent=47 // pred_region
          %s1314 = smul.u32 16, %s27
          %s1316 = ssub.s32 2048, 2048
          %1317 = vsyncadd %s1307, %s1316
          %s1318 = smul.addr %s1314, 128
          %s1319 = scalar_lea.hbm %s7, %s1318
          %s1320 = sshll.u32 %s1310, 4
          %s1321 = int_to_ptr.vmem [resolvable:$true] %s1320
          %1326 = dma.vmem_to_hbm [thread:$0]  %s1321, 2048, %s1319, %s1307, 128, 128, 8
        $region80: #{tpu_custom_call.1} parent=47 // pred_fallthru
          _
      $region48: #{tpu_custom_call.1} parent=5 // pred_fallthru
        _
      %p1327 = scmp.le.s32.totalorder 2, %s22
      // Predicated region
      $region81: #{tpu_custom_call.1} parent=5 // pred_check
        %p1328 = pneg %p1327
      $region82: #{tpu_custom_call.1} parent=5 // pred_check_branch
        %1330 = sbr.rel (%p1328) target = $region84
      $region83: #{tpu_custom_call.1} parent=5 // pred_region
        %s1331 = ssub.s32 %s22, 2
        // Predicated region
        $region85: #{tpu_custom_call.1} parent=83 // pred_check
          %p1332 = pneg %p203
        $region86: #{tpu_custom_call.1} parent=83 // pred_check_branch
          %1334 = sbr.rel (%p1332) target = $region88
        $region87: #{tpu_custom_call.1} parent=83 // pred_region
          %s1335 = sand.u32 %s188, 1
          %s1336 = scalar_lea.sflag [#allocation4], %s1335
          %s1337 = sand.u32 %s188, 1
          %s1338 = smul.addr %s1337, 128
          %s1339 = scalar_lea.vmem [#allocation14], %s1338
          %1340 = dma.done %s1336, 2048
        $region88: #{tpu_custom_call.1} parent=83 // pred_fallthru
          _
      $region84: #{tpu_custom_call.1} parent=5 // pred_fallthru
        _
    $region6: #{tpu_custom_call.1} parent=1 // loop_footer
      %s26 = sadd.s32 1, %s22
    $region7: #{tpu_custom_call.1} parent=1 // loop_footer_branch
      %21 = sbr.rel target = $region3
    $region8: #{tpu_custom_call.1} parent=1 // loop_exit
      _
    %1341 = vsyncpa [#allocation3], 1
    %s1342 = scalar_lea.sflag [#allocation3], 1
    %1343 = vsyncpa %s1342, 1
    %1344 = vsyncpa [#allocation6], 1
    %1345 = vsyncpa [#allocation9], 1
    %1346 = vsyncpa [#allocation12], 1
    %1347 = vsyncpa [#allocation4], 1
    %s1348 = scalar_lea.sflag [#allocation4], 1
    %1349 = vsyncpa %s1348, 1

</llo_original>
